<compile_context>
chip_gen: v7x
topology: tpu7x:2x2x1
jax: 0.10.0
libtpu: 0.0.40
codegen_flags: <defaults>
</compile_context>

<pallas_src>
import math
import functools

import numpy as np
import jax
import jax.numpy as jnp
from jax import lax
from jax.experimental import pallas as pl
from jax.experimental.pallas import tpu as pltpu


def _mha_kernel(q_ref, k_ref, v_ref,
                wq_ref, bq_ref, wk_ref, bk_ref, wv_ref, bv_ref,
                wp_ref, bp_ref, gamma_ref, beta_ref,
                out_ref, attn_ref,
                qh_ref, kh_ref, vh_ref, ctx_ref,
                *, heads, d_k, ln_eps, compute_dtype, approx_recip):
    # Per grid step (b, i):
    #   q_ref/out_ref : (1, TQ, D)        k_ref/v_ref : (1, S, D)  (compute dtype)
    #   weights       : (D, D) compute    biases/gamma/beta : (1, D) f32
    #   attn_ref      : (1, H, TQ, S)
    #   scratch       : qh (H, TQ, d_k), kh/vh (H, S, d_k), ctx (TQ, D)  compute dtype
    i = pl.program_id(1)

    # ---- K/V projection + head packing: ONCE PER BATCH (hoisted out of q tiles). ---
    # The q-tile axis is "arbitrary" (sequential per core) and kh/vh scratch persists
    # across grid steps, so tiles i > 0 reuse the projected K/V.
    @pl.when(i == 0)
    def _project_kv():
        xk = k_ref[0].astype(compute_dtype)                       # (S, D)
        xv = v_ref[0].astype(compute_dtype)
        k_p = (jnp.dot(xk, wk_ref[...], preferred_element_type=jnp.float32)
               + bk_ref[...]).astype(compute_dtype)
        v_p = (jnp.dot(xv, wv_ref[...], preferred_element_type=jnp.float32)
               + bv_ref[...]).astype(compute_dtype)
        # Head split == column slices of the projection (lane-aligned when d_k is a
        # multiple of 128; for small d_k these are masked stores, only H per batch).
        for h in range(heads):
            lo = h * d_k
            kh_ref[h] = k_p[:, lo:lo + d_k]
            vh_ref[h] = v_p[:, lo:lo + d_k]

    # ---- Q projection for this query tile. ------------------------------------------
    q_res = q_ref[0].astype(jnp.float32)                          # residual, f32 (TQ, D)
    xq = q_res.astype(compute_dtype)
    q_p = jnp.dot(xq, wq_ref[...], preferred_element_type=jnp.float32) + bq_ref[...]
    # Fold 1/sqrt(d_k) into q once (TQ*D mults instead of H*TQ*S on the score matrices).
    q_p = (q_p * (1.0 / math.sqrt(d_k))).astype(compute_dtype)
    for h in range(heads):
        lo = h * d_k
        qh_ref[h] = q_p[:, lo:lo + d_k]

    q_h = qh_ref[...]                                             # (H, TQ, d_k)
    k_h = kh_ref[...]                                             # (H, S, d_k)
    v_h = vh_ref[...]                                             # (H, S, d_k)

    # Head-batched scores; contracting on d absorbs the K "transpose" (no k.T materialized).
    # NOTE: MXU is underfilled when d_k < 128/256 -- large TQ keeps the M dim fed.
    scores = jnp.einsum('hqd,hkd->hqk', q_h, k_h,
                        preferred_element_type=jnp.float32)       # (H, TQ, S) f32

    # Softmax over keys (mask=None path); elementwise math stays f32 (v5e-safe, exact).
    m = jnp.max(scores, axis=-1, keepdims=True)
    e = jnp.exp(scores - m)
    # TODO(synk): if EUP exp becomes the binding slot on v6e/v7x, evaluate bf16 exp here.
    denom = jnp.sum(e, axis=-1, keepdims=True)
    probs_f32 = e * pl.reciprocal(denom, approx=approx_recip)     # (H, TQ, S)

    # Single cast to compute dtype reused for both the attn writeback and the PV matmul.
    probs = probs_f32.astype(compute_dtype)
    if np.dtype(attn_ref.dtype) == np.dtype(compute_dtype):
        attn_ref[0] = probs
    else:
        attn_ref[0] = probs_f32.astype(attn_ref.dtype)
    # dropout1: identity (eval mode)

    ctx_h = jnp.einsum('hqk,hkd->hqd', probs, v_h,
                       preferred_element_type=jnp.float32)        # (H, TQ, d_k) f32
    ctx_c = ctx_h.astype(compute_dtype)
    # "transpose(1,2).contiguous().view(bs,-1,D)" == write head slices into (TQ, D) scratch.
    for h in range(heads):
        ctx_ref[:, h * d_k:(h + 1) * d_k] = ctx_c[h]

    proj = jnp.dot(ctx_ref[...], wp_ref[...],
                   preferred_element_type=jnp.float32) + bp_ref[...]
    # dropout2: identity (eval mode)

    x = q_res + proj
    mean = jnp.mean(x, axis=-1, keepdims=True)
    var = jnp.mean(jnp.square(x - mean), axis=-1, keepdims=True)
    x_norm = (x - mean) * lax.rsqrt(var + ln_eps)
    out_ref[0] = (x_norm * gamma_ref[...] + beta_ref[...]).astype(out_ref.dtype)


def _pick_vmem_limit():
    """Pick a scoped-VMEM budget with headroom below this generation's physical VMEM.

    Hardware probe only -- no kernel/lowering error is masked here; a failed probe
    just falls back to the conservative (v7x-sized, 64 MiB) assumption.
    """
    try:
        cap = pltpu.get_tpu_info().vmem_capacity_bytes
    except Exception:
        cap = 64 * 1024 * 1024
    if cap >= 128 * 1024 * 1024:          # v5e / v6e: 128 MiB physical
        return 100 * 1024 * 1024
    return min(52 * 1024 * 1024, (cap * 13) // 16)   # v7x: 64 MiB physical


def _choose_block_q(seq_len, target):
    """Largest query tile <= target that divides S with a sublane-friendly size
    (multiple of 8), falling back to the whole sequence (always BlockSpec-legal)."""
    for t in range(min(target, seq_len), 0, -1):
        if seq_len % t == 0 and (t % 8 == 0 or t == seq_len):
            return t
    return seq_len


def _build_call(B, S, D, heads, block_q, compute_dtype, approx_recip,
                out_dtype, attn_dtype, vmem_limit):
    d_k = D // heads
    n_q = S // block_q

    kernel = functools.partial(
        _mha_kernel, heads=heads, d_k=d_k, ln_eps=1e-5,
        compute_dtype=compute_dtype, approx_recip=approx_recip)

    # Parameter blocks are grid-constant: same block index every step -> the pipeline
    # does not re-DMA them (VMEM cost only, which the budget below accounts for).
    mat_spec = pl.BlockSpec((D, D), lambda b, i: (0, 0))
    vec_spec = pl.BlockSpec((1, D), lambda b, i: (0, 0))

    q_spec = pl.BlockSpec((1, block_q, D), lambda b, i: (b, i, 0))
    kv_spec = pl.BlockSpec((1, S, D), lambda b, i: (b, 0, 0))   # constant over i

    out_specs = (
        pl.BlockSpec((1, block_q, D), lambda b, i: (b, i, 0)),
        pl.BlockSpec((1, heads, block_q, S), lambda b, i: (b, 0, i, 0)),
    )
    out_shapes = (
        jax.ShapeDtypeStruct((B, S, D), out_dtype),
        jax.ShapeDtypeStruct((B, heads, S, S), attn_dtype),
    )

    scratch_shapes = [
        pltpu.VMEM((heads, block_q, d_k), compute_dtype),   # q heads (this tile)
        pltpu.VMEM((heads, S, d_k), compute_dtype),         # k heads (persists per batch)
        pltpu.VMEM((heads, S, d_k), compute_dtype),         # v heads (persists per batch)
        pltpu.VMEM((block_q, D), compute_dtype),            # merged context
    ]

    return pl.pallas_call(
        kernel,
        out_shape=out_shapes,
        grid_spec=pltpu.PrefetchScalarGridSpec(
            num_scalar_prefetch=0,
            grid=(B, n_q),
            in_specs=[q_spec, kv_spec, kv_spec,
                      mat_spec, vec_spec,        # Wq, bq
                      mat_spec, vec_spec,        # Wk, bk
                      mat_spec, vec_spec,        # Wv, bv
                      mat_spec, vec_spec,        # Wproj, bproj
                      vec_spec, vec_spec],       # gamma, beta
            out_specs=out_specs,
            scratch_shapes=scratch_shapes),
        compiler_params=pltpu.CompilerParams(
            # q-tile axis MUST be sequential ("arbitrary") so the pl.when(i==0)
            # K/V hoist sees its scratch populated; batch stays parallel for megacore.
            dimension_semantics=("parallel", "arbitrary"),
            vmem_limit_bytes=vmem_limit),
    )


def multi_head_attention(q, k, v, params, *, heads, compute_dtype=jnp.bfloat16,
                         block_q=None, approx_recip=None, attn_dtype=None):
    """q, k, v: [B, S, D]. Returns (out [B, S, D], attn [B, H, S, S]).

    attn is returned in `attn_dtype` (defaults to compute_dtype, i.e. bf16 on the
    bf16 path); pass attn_dtype=jnp.float32 if exact f32 attention weights are needed.
    approx_recip=True (default on bf16 path) means softmax rows sum to ~1 (EUP recip).
    """
    B, S, D = q.shape
    assert D % heads == 0, "d_model must be divisible by heads"
    if approx_recip is None:
        approx_recip = compute_dtype != jnp.float32
    if attn_dtype is None:
        attn_dtype = compute_dtype   # halves the [B,H,S,S] HBM writeback on bf16 path

    vmem_limit = _pick_vmem_limit()
    if block_q is None:
        # Bigger tiles on 128-MiB parts (v5e/v6e) amortize per-step overhead and fill
        # the MXU M dim; stay conservative on v7x's 64 MiB.
        block_q = 256 if vmem_limit >= 96 * 1024 * 1024 else 128
    tq = _choose_block_q(S, block_q)
    # NOTE: if S/D are not (8, 128)-friendly, blocks fall back to full-extent dims;
    # padding S/D in the wrapper would recover full lane width for odd shapes.

    cd = compute_dtype
    # Cast K/V (and weights) to the compute dtype in the wrapper: halves HBM->VMEM DMA
    # and the double-buffered (1, S, D) input blocks on the bf16 path. q stays in its
    # original dtype so the residual-add and LayerNorm match the PyTorch reference.
    args = (q, k.astype(cd), v.astype(cd),
            params["wq"].astype(cd), params["bq"],
            params["wk"].astype(cd), params["bk"],
            params["wv"].astype(cd), params["bv"],
            params["wp"].astype(cd), params["bp"],
            params["gamma"], params["beta"])

    call = _build_call(B, S, D, heads, tq, cd, approx_recip,
                       q.dtype, attn_dtype, vmem_limit)
    return call(*args)


def _reference(q, k, v, params, *, heads, compute_dtype=jnp.float32):
    """Pure-JAX mirror of the PyTorch forward (eval mode). With compute_dtype=f32 this
    is the exact module math; with bf16 it mirrors the kernel's operand casts."""
    B, S, D = q.shape
    d_k = D // heads
    cd = compute_dtype

    def mm(x, w):
        return jnp.dot(x.astype(cd), w.astype(cd), preferred_element_type=jnp.float32)

    qp = mm(q, params["wq"]) + params["bq"]
    kp = mm(k, params["wk"]) + params["bk"]
    vp = mm(v, params["wv"]) + params["bv"]

    qp = (qp / math.sqrt(d_k)).reshape(B, S, heads, d_k).transpose(0, 2, 1, 3)
    kp = kp.reshape(B, S, heads, d_k).transpose(0, 2, 1, 3)
    vp = vp.reshape(B, S, heads, d_k).transpose(0, 2, 1, 3)

    scores = jnp.einsum("bhqd,bhkd->bhqk", qp.astype(cd), kp.astype(cd),
                        preferred_element_type=jnp.float32)
    attn = jax.nn.softmax(scores, axis=-1)
    ctx = jnp.einsum("bhqk,bhkd->bhqd", attn.astype(cd), vp.astype(cd),
                     preferred_element_type=jnp.float32)
    ctx = ctx.transpose(0, 2, 1, 3).reshape(B, S, D)
    out = mm(ctx, params["wp"]) + params["bp"]
    x = q + out
    mean = jnp.mean(x, axis=-1, keepdims=True)
    var = jnp.mean((x - mean) ** 2, axis=-1, keepdims=True)
    x = (x - mean) * lax.rsqrt(var + 1e-5)
    return x * params["gamma"] + params["beta"], attn


if __name__ == "__main__":
    B, S, D, H = 2, 8, 32, 4   # batch, seq, d_model, heads

    key = jax.random.PRNGKey(0)
    keys = jax.random.split(key, 11)

    scale = 1.0 / math.sqrt(D)
    params = {
        "wq": jax.random.normal(keys[0], (D, D), jnp.float32) * scale,
        "bq": jax.random.normal(keys[1], (1, D), jnp.float32) * 0.1,
        "wk": jax.random.normal(keys[2], (D, D), jnp.float32) * scale,
        "bk": jax.random.normal(keys[3], (1, D), jnp.float32) * 0.1,
        "wv": jax.random.normal(keys[4], (D, D), jnp.float32) * scale,
        "bv": jax.random.normal(keys[5], (1, D), jnp.float32) * 0.1,
        "wp": jax.random.normal(keys[6], (D, D), jnp.float32) * scale,
        "bp": jax.random.normal(keys[7], (1, D), jnp.float32) * 0.1,
        "gamma": jnp.ones((1, D), jnp.float32),
        "beta": jnp.zeros((1, D), jnp.float32),
    }

    q = jax.random.normal(keys[8], (B, S, D), jnp.float32)
    k = jax.random.normal(keys[9], (B, S, D), jnp.float32)
    v = jax.random.normal(keys[10], (B, S, D), jnp.float32)

    # 1) f32 compute path: tight match to the PyTorch module math (attn stored f32).
    out32, attn32 = jax.block_until_ready(
        multi_head_attention(q, k, v, params, heads=H, compute_dtype=jnp.float32))
    ref_out, ref_attn = _reference(q, k, v, params, heads=H, compute_dtype=jnp.float32)
    assert jnp.allclose(out32, ref_out, rtol=1e-3, atol=1e-3), "f32 output mismatch"
    assert jnp.allclose(attn32, ref_attn, rtol=1e-3, atol=1e-3), "f32 attn mismatch"

    # 2) Default bf16-operand path (full MXU rate), f32 accumulation, bf16 attn writeback.
    out16, attn16 = jax.block_until_ready(
        multi_head_attention(q, k, v, params, heads=H))
    ref16_out, ref16_attn = _reference(q, k, v, params, heads=H,
                                       compute_dtype=jnp.bfloat16)
    assert jnp.allclose(out16, ref16_out, rtol=1e-2, atol=1e-2), "bf16 output mismatch"
    assert jnp.allclose(attn16.astype(jnp.float32), ref16_attn,
                        rtol=1e-2, atol=1e-2), "bf16 attn mismatch"

    # TODO(synk): dropout1/dropout2 omitted (module run in eval/inference mode);
    # only the mask=None path of forward() is implemented.
    print("KERNEL_OK")
</pallas_src>

<mosaic_0001>
module attributes {stable_mosaic.version = 11 : i64} {
  func.func @_mha_kernel(%arg0: i32, %arg1: i32, %arg2: memref<1x8x32xf32, #tpu.memory_space<vmem>>, %arg3: memref<1x8x32xf32, #tpu.memory_space<vmem>>, %arg4: memref<1x8x32xf32, #tpu.memory_space<vmem>>, %arg5: memref<32x32xf32, #tpu.memory_space<vmem>>, %arg6: memref<1x32xf32, #tpu.memory_space<vmem>>, %arg7: memref<32x32xf32, #tpu.memory_space<vmem>>, %arg8: memref<1x32xf32, #tpu.memory_space<vmem>>, %arg9: memref<32x32xf32, #tpu.memory_space<vmem>>, %arg10: memref<1x32xf32, #tpu.memory_space<vmem>>, %arg11: memref<32x32xf32, #tpu.memory_space<vmem>>, %arg12: memref<1x32xf32, #tpu.memory_space<vmem>>, %arg13: memref<1x32xf32, #tpu.memory_space<vmem>>, %arg14: memref<1x32xf32, #tpu.memory_space<vmem>>, %arg15: memref<1x8x32xf32, #tpu.memory_space<vmem>>, %arg16: memref<1x4x8x8xf32, #tpu.memory_space<vmem>>, %arg17: memref<4x8x8xf32, #tpu.memory_space<vmem>>, %arg18: memref<4x8x8xf32, #tpu.memory_space<vmem>>, %arg19: memref<4x8x8xf32, #tpu.memory_space<vmem>>, %arg20: memref<8x32xf32, #tpu.memory_space<vmem>>) attributes {dimension_semantics = [#tpu.dimension_semantics<parallel>, #tpu.dimension_semantics<arbitrary>], iteration_bounds = array<i64: 2, 1>, scalar_prefetch = 0 : i64, scratch_operands = 4 : i64, tpu.core_type = #tpu.core_type<tc>, window_params = [{transform_indices = @transform_0, window_bounds = array<i64: 1, 8, 32>}, {transform_indices = @transform_1, window_bounds = array<i64: 1, 8, 32>}, {transform_indices = @transform_2, window_bounds = array<i64: 1, 8, 32>}, {pipeline_mode = #tpu.pipeline_mode<synchronous>, transform_indices = @transform_3, window_bounds = array<i64: 32, 32>}, {pipeline_mode = #tpu.pipeline_mode<synchronous>, transform_indices = @transform_4, window_bounds = array<i64: 1, 32>}, {pipeline_mode = #tpu.pipeline_mode<synchronous>, transform_indices = @transform_5, window_bounds = array<i64: 32, 32>}, {pipeline_mode = #tpu.pipeline_mode<synchronous>, transform_indices = @transform_6, window_bounds = array<i64: 1, 32>}, {pipeline_mode = #tpu.pipeline_mode<synchronous>, transform_indices = @transform_7, window_bounds = array<i64: 32, 32>}, {pipeline_mode = #tpu.pipeline_mode<synchronous>, transform_indices = @transform_8, window_bounds = array<i64: 1, 32>}, {pipeline_mode = #tpu.pipeline_mode<synchronous>, transform_indices = @transform_9, window_bounds = array<i64: 32, 32>}, {pipeline_mode = #tpu.pipeline_mode<synchronous>, transform_indices = @transform_10, window_bounds = array<i64: 1, 32>}, {pipeline_mode = #tpu.pipeline_mode<synchronous>, transform_indices = @transform_11, window_bounds = array<i64: 1, 32>}, {pipeline_mode = #tpu.pipeline_mode<synchronous>, transform_indices = @transform_12, window_bounds = array<i64: 1, 32>}, {transform_indices = @transform_13, window_bounds = array<i64: 1, 8, 32>}, {transform_indices = @transform_14, window_bounds = array<i64: 1, 4, 8, 8>}]} {
    %c0_i32 = arith.constant 0 : i32
    %0 = arith.cmpi eq, %arg1, %c0_i32 : i32
    %1 = arith.extui %0 : i1 to i32
    %c0_i32_0 = arith.constant 0 : i32
    %2 = arith.cmpi ne, %1, %c0_i32_0 : i32
    scf.if %2 {
      %c0_58 = arith.constant 0 : index
      %c0_59 = arith.constant 0 : index
      %c0_60 = arith.constant 0 : index
      %92 = vector.load %arg3[%c0_58, %c0_59, %c0_60] : memref<1x8x32xf32, #tpu.memory_space<vmem>>, vector<1x8x32xf32>
      %93 = vector.shape_cast %92 : vector<1x8x32xf32> to vector<8x32xf32>
      %c0_61 = arith.constant 0 : index
      %c0_62 = arith.constant 0 : index
      %c0_63 = arith.constant 0 : index
      %94 = vector.load %arg4[%c0_61, %c0_62, %c0_63] : memref<1x8x32xf32, #tpu.memory_space<vmem>>, vector<1x8x32xf32>
      %95 = vector.shape_cast %94 : vector<1x8x32xf32> to vector<8x32xf32>
      %c0_64 = arith.constant 0 : index
      %c0_65 = arith.constant 0 : index
      %96 = vector.load %arg7[%c0_64, %c0_65] : memref<32x32xf32, #tpu.memory_space<vmem>>, vector<32x32xf32>
      %cst_66 = arith.constant dense<0.000000e+00> : vector<8x32xf32>
      %97 = tpu.matmul %93, %96, %cst_66 {dimension_numbers = #tpu.dot_dimension_numbers<[1], [0], [0], [1], [0, 0, 1, 1], [], []>} : vector<8x32xf32>, vector<32x32xf32>, vector<8x32xf32> -> vector<8x32xf32>
      %c0_67 = arith.constant 0 : index
      %c0_68 = arith.constant 0 : index
      %98 = vector.load %arg8[%c0_67, %c0_68] : memref<1x32xf32, #tpu.memory_space<vmem>>, vector<1x32xf32>
      %99 = vector.broadcast %98 : vector<1x32xf32> to vector<8x32xf32>
      %100 = arith.addf %97, %99 : vector<8x32xf32>
      %c0_69 = arith.constant 0 : index
      %c0_70 = arith.constant 0 : index
      %101 = vector.load %arg9[%c0_69, %c0_70] : memref<32x32xf32, #tpu.memory_space<vmem>>, vector<32x32xf32>
      %cst_71 = arith.constant dense<0.000000e+00> : vector<8x32xf32>
      %102 = tpu.matmul %95, %101, %cst_71 {dimension_numbers = #tpu.dot_dimension_numbers<[1], [0], [0], [1], [0, 0, 1, 1], [], []>} : vector<8x32xf32>, vector<32x32xf32>, vector<8x32xf32> -> vector<8x32xf32>
      %c0_72 = arith.constant 0 : index
      %c0_73 = arith.constant 0 : index
      %103 = vector.load %arg10[%c0_72, %c0_73] : memref<1x32xf32, #tpu.memory_space<vmem>>, vector<1x32xf32>
      %104 = vector.broadcast %103 : vector<1x32xf32> to vector<8x32xf32>
      %105 = arith.addf %102, %104 : vector<8x32xf32>
      %106 = vector.extract_strided_slice %100 {offsets = [0, 0], sizes = [8, 8], strides = [1, 1]} : vector<8x32xf32> to vector<8x8xf32>
      %c0_74 = arith.constant 0 : index
      %c0_75 = arith.constant 0 : index
      %c0_76 = arith.constant 0 : index
      %107 = vector.load %arg18[%c0_74, %c0_75, %c0_76] : memref<4x8x8xf32, #tpu.memory_space<vmem>>, vector<1x8x8xf32>
      %108 = vector.shape_cast %107 : vector<1x8x8xf32> to vector<8x8xf32>
      %109 = vector.shape_cast %106 : vector<8x8xf32> to vector<1x8x8xf32>
      tpu.vector_store %arg18[%c0_74, %c0_75, %c0_76], %109 {strides = array<i32>} : memref<4x8x8xf32, #tpu.memory_space<vmem>>, vector<1x8x8xf32>,
      %110 = vector.extract_strided_slice %105 {offsets = [0, 0], sizes = [8, 8], strides = [1, 1]} : vector<8x32xf32> to vector<8x8xf32>
      %c0_77 = arith.constant 0 : index
      %c0_78 = arith.constant 0 : index
      %c0_79 = arith.constant 0 : index
      %111 = vector.load %arg19[%c0_77, %c0_78, %c0_79] : memref<4x8x8xf32, #tpu.memory_space<vmem>>, vector<1x8x8xf32>
      %112 = vector.shape_cast %111 : vector<1x8x8xf32> to vector<8x8xf32>
      %113 = vector.shape_cast %110 : vector<8x8xf32> to vector<1x8x8xf32>
      tpu.vector_store %arg19[%c0_77, %c0_78, %c0_79], %113 {strides = array<i32>} : memref<4x8x8xf32, #tpu.memory_space<vmem>>, vector<1x8x8xf32>,
      %114 = vector.extract_strided_slice %100 {offsets = [0, 8], sizes = [8, 8], strides = [1, 1]} : vector<8x32xf32> to vector<8x8xf32>
      %c1_80 = arith.constant 1 : index
      %c0_81 = arith.constant 0 : index
      %c0_82 = arith.constant 0 : index
      %115 = vector.load %arg18[%c1_80, %c0_81, %c0_82] : memref<4x8x8xf32, #tpu.memory_space<vmem>>, vector<1x8x8xf32>
      %116 = vector.shape_cast %115 : vector<1x8x8xf32> to vector<8x8xf32>
      %117 = vector.shape_cast %114 : vector<8x8xf32> to vector<1x8x8xf32>
      tpu.vector_store %arg18[%c1_80, %c0_81, %c0_82], %117 {strides = array<i32>} : memref<4x8x8xf32, #tpu.memory_space<vmem>>, vector<1x8x8xf32>,
      %118 = vector.extract_strided_slice %105 {offsets = [0, 8], sizes = [8, 8], strides = [1, 1]} : vector<8x32xf32> to vector<8x8xf32>
      %c1_83 = arith.constant 1 : index
      %c0_84 = arith.constant 0 : index
      %c0_85 = arith.constant 0 : index
      %119 = vector.load %arg19[%c1_83, %c0_84, %c0_85] : memref<4x8x8xf32, #tpu.memory_space<vmem>>, vector<1x8x8xf32>
      %120 = vector.shape_cast %119 : vector<1x8x8xf32> to vector<8x8xf32>
      %121 = vector.shape_cast %118 : vector<8x8xf32> to vector<1x8x8xf32>
      tpu.vector_store %arg19[%c1_83, %c0_84, %c0_85], %121 {strides = array<i32>} : memref<4x8x8xf32, #tpu.memory_space<vmem>>, vector<1x8x8xf32>,
      %122 = vector.extract_strided_slice %100 {offsets = [0, 16], sizes = [8, 8], strides = [1, 1]} : vector<8x32xf32> to vector<8x8xf32>
      %c2_86 = arith.constant 2 : index
      %c0_87 = arith.constant 0 : index
      %c0_88 = arith.constant 0 : index
      %123 = vector.load %arg18[%c2_86, %c0_87, %c0_88] : memref<4x8x8xf32, #tpu.memory_space<vmem>>, vector<1x8x8xf32>
      %124 = vector.shape_cast %123 : vector<1x8x8xf32> to vector<8x8xf32>
      %125 = vector.shape_cast %122 : vector<8x8xf32> to vector<1x8x8xf32>
      tpu.vector_store %arg18[%c2_86, %c0_87, %c0_88], %125 {strides = array<i32>} : memref<4x8x8xf32, #tpu.memory_space<vmem>>, vector<1x8x8xf32>,
      %126 = vector.extract_strided_slice %105 {offsets = [0, 16], sizes = [8, 8], strides = [1, 1]} : vector<8x32xf32> to vector<8x8xf32>
      %c2_89 = arith.constant 2 : index
      %c0_90 = arith.constant 0 : index
      %c0_91 = arith.constant 0 : index
      %127 = vector.load %arg19[%c2_89, %c0_90, %c0_91] : memref<4x8x8xf32, #tpu.memory_space<vmem>>, vector<1x8x8xf32>
      %128 = vector.shape_cast %127 : vector<1x8x8xf32> to vector<8x8xf32>
      %129 = vector.shape_cast %126 : vector<8x8xf32> to vector<1x8x8xf32>
      tpu.vector_store %arg19[%c2_89, %c0_90, %c0_91], %129 {strides = array<i32>} : memref<4x8x8xf32, #tpu.memory_space<vmem>>, vector<1x8x8xf32>,
      %130 = vector.extract_strided_slice %100 {offsets = [0, 24], sizes = [8, 8], strides = [1, 1]} : vector<8x32xf32> to vector<8x8xf32>
      %c3_92 = arith.constant 3 : index
      %c0_93 = arith.constant 0 : index
      %c0_94 = arith.constant 0 : index
      %131 = vector.load %arg18[%c3_92, %c0_93, %c0_94] : memref<4x8x8xf32, #tpu.memory_space<vmem>>, vector<1x8x8xf32>
      %132 = vector.shape_cast %131 : vector<1x8x8xf32> to vector<8x8xf32>
      %133 = vector.shape_cast %130 : vector<8x8xf32> to vector<1x8x8xf32>
      tpu.vector_store %arg18[%c3_92, %c0_93, %c0_94], %133 {strides = array<i32>} : memref<4x8x8xf32, #tpu.memory_space<vmem>>, vector<1x8x8xf32>,
      %134 = vector.extract_strided_slice %105 {offsets = [0, 24], sizes = [8, 8], strides = [1, 1]} : vector<8x32xf32> to vector<8x8xf32>
      %c3_95 = arith.constant 3 : index
      %c0_96 = arith.constant 0 : index
      %c0_97 = arith.constant 0 : index
      %135 = vector.load %arg19[%c3_95, %c0_96, %c0_97] : memref<4x8x8xf32, #tpu.memory_space<vmem>>, vector<1x8x8xf32>
      %136 = vector.shape_cast %135 : vector<1x8x8xf32> to vector<8x8xf32>
      %137 = vector.shape_cast %134 : vector<8x8xf32> to vector<1x8x8xf32>
      tpu.vector_store %arg19[%c3_95, %c0_96, %c0_97], %137 {strides = array<i32>} : memref<4x8x8xf32, #tpu.memory_space<vmem>>, vector<1x8x8xf32>,
    } else {
    }
    %c0 = arith.constant 0 : index
    %c0_1 = arith.constant 0 : index
    %c0_2 = arith.constant 0 : index
    %3 = vector.load %arg2[%c0, %c0_1, %c0_2] : memref<1x8x32xf32, #tpu.memory_space<vmem>>, vector<1x8x32xf32>
    %4 = vector.shape_cast %3 : vector<1x8x32xf32> to vector<8x32xf32>
    %c0_3 = arith.constant 0 : index
    %c0_4 = arith.constant 0 : index
    %5 = vector.load %arg5[%c0_3, %c0_4] : memref<32x32xf32, #tpu.memory_space<vmem>>, vector<32x32xf32>
    %cst = arith.constant dense<0.000000e+00> : vector<8x32xf32>
    %6 = tpu.matmul %4, %5, %cst {dimension_numbers = #tpu.dot_dimension_numbers<[1], [0], [0], [1], [0, 0, 1, 1], [], []>} : vector<8x32xf32>, vector<32x32xf32>, vector<8x32xf32> -> vector<8x32xf32>
    %c0_5 = arith.constant 0 : index
    %c0_6 = arith.constant 0 : index
    %7 = vector.load %arg6[%c0_5, %c0_6] : memref<1x32xf32, #tpu.memory_space<vmem>>, vector<1x32xf32>
    %8 = vector.broadcast %7 : vector<1x32xf32> to vector<8x32xf32>
    %9 = arith.addf %6, %8 : vector<8x32xf32>
    %cst_7 = arith.constant 0.353553385 : f32
    %10 = vector.broadcast %cst_7 : f32 to vector<8x32xf32>
    %11 = arith.mulf %9, %10 : vector<8x32xf32>
    %12 = vector.extract_strided_slice %11 {offsets = [0, 0], sizes = [8, 8], strides = [1, 1]} : vector<8x32xf32> to vector<8x8xf32>
    %c0_8 = arith.constant 0 : index
    %c0_9 = arith.constant 0 : index
    %c0_10 = arith.constant 0 : index
    %13 = vector.load %arg17[%c0_8, %c0_9, %c0_10] : memref<4x8x8xf32, #tpu.memory_space<vmem>>, vector<1x8x8xf32>
    %14 = vector.shape_cast %13 : vector<1x8x8xf32> to vector<8x8xf32>
    %15 = vector.shape_cast %12 : vector<8x8xf32> to vector<1x8x8xf32>
    tpu.vector_store %arg17[%c0_8, %c0_9, %c0_10], %15 {strides = array<i32>} : memref<4x8x8xf32, #tpu.memory_space<vmem>>, vector<1x8x8xf32>,
    %16 = vector.extract_strided_slice %11 {offsets = [0, 8], sizes = [8, 8], strides = [1, 1]} : vector<8x32xf32> to vector<8x8xf32>
    %c1 = arith.constant 1 : index
    %c0_11 = arith.constant 0 : index
    %c0_12 = arith.constant 0 : index
    %17 = vector.load %arg17[%c1, %c0_11, %c0_12] : memref<4x8x8xf32, #tpu.memory_space<vmem>>, vector<1x8x8xf32>
    %18 = vector.shape_cast %17 : vector<1x8x8xf32> to vector<8x8xf32>
    %19 = vector.shape_cast %16 : vector<8x8xf32> to vector<1x8x8xf32>
    tpu.vector_store %arg17[%c1, %c0_11, %c0_12], %19 {strides = array<i32>} : memref<4x8x8xf32, #tpu.memory_space<vmem>>, vector<1x8x8xf32>,
    %20 = vector.extract_strided_slice %11 {offsets = [0, 16], sizes = [8, 8], strides = [1, 1]} : vector<8x32xf32> to vector<8x8xf32>
    %c2 = arith.constant 2 : index
    %c0_13 = arith.constant 0 : index
    %c0_14 = arith.constant 0 : index
    %21 = vector.load %arg17[%c2, %c0_13, %c0_14] : memref<4x8x8xf32, #tpu.memory_space<vmem>>, vector<1x8x8xf32>
    %22 = vector.shape_cast %21 : vector<1x8x8xf32> to vector<8x8xf32>
    %23 = vector.shape_cast %20 : vector<8x8xf32> to vector<1x8x8xf32>
    tpu.vector_store %arg17[%c2, %c0_13, %c0_14], %23 {strides = array<i32>} : memref<4x8x8xf32, #tpu.memory_space<vmem>>, vector<1x8x8xf32>,
    %24 = vector.extract_strided_slice %11 {offsets = [0, 24], sizes = [8, 8], strides = [1, 1]} : vector<8x32xf32> to vector<8x8xf32>
    %c3 = arith.constant 3 : index
    %c0_15 = arith.constant 0 : index
    %c0_16 = arith.constant 0 : index
    %25 = vector.load %arg17[%c3, %c0_15, %c0_16] : memref<4x8x8xf32, #tpu.memory_space<vmem>>, vector<1x8x8xf32>
    %26 = vector.shape_cast %25 : vector<1x8x8xf32> to vector<8x8xf32>
    %27 = vector.shape_cast %24 : vector<8x8xf32> to vector<1x8x8xf32>
    tpu.vector_store %arg17[%c3, %c0_15, %c0_16], %27 {strides = array<i32>} : memref<4x8x8xf32, #tpu.memory_space<vmem>>, vector<1x8x8xf32>,
    %c0_17 = arith.constant 0 : index
    %c0_18 = arith.constant 0 : index
    %c0_19 = arith.constant 0 : index
    %28 = vector.load %arg17[%c0_17, %c0_18, %c0_19] : memref<4x8x8xf32, #tpu.memory_space<vmem>>, vector<4x8x8xf32>
    %c0_20 = arith.constant 0 : index
    %c0_21 = arith.constant 0 : index
    %c0_22 = arith.constant 0 : index
    %29 = vector.load %arg18[%c0_20, %c0_21, %c0_22] : memref<4x8x8xf32, #tpu.memory_space<vmem>>, vector<4x8x8xf32>
    %c0_23 = arith.constant 0 : index
    %c0_24 = arith.constant 0 : index
    %c0_25 = arith.constant 0 : index
    %30 = vector.load %arg19[%c0_23, %c0_24, %c0_25] : memref<4x8x8xf32, #tpu.memory_space<vmem>>, vector<4x8x8xf32>
    "tpu.trace_start"() <{level = 10 : i32, message = "hqd,hkd->hqk"}> : () -> ()
    %cst_26 = arith.constant dense<0.000000e+00> : vector<4x8x8xf32>
    %31 = tpu.matmul %28, %29, %cst_26 {dimension_numbers = #tpu.dot_dimension_numbers<[2], [2], [1], [1], [0, 0, 0, 1, 1, 1], [0], [0]>} : vector<4x8x8xf32>, vector<4x8x8xf32>, vector<4x8x8xf32> -> vector<4x8x8xf32>
    "tpu.trace_stop"() : () -> ()
    %cst_27 = arith.constant dense<0xFF800000> : vector<4x8xf32>
    %32 = vector.multi_reduction <maximumf>, %31, %cst_27 [2] : vector<4x8x8xf32> to vector<4x8xf32>
    %33 = vector.shape_cast %32 : vector<4x8xf32> to vector<4x8x1xf32>
    %34 = vector.broadcast %33 : vector<4x8x1xf32> to vector<4x8x8xf32>
    %35 = arith.subf %31, %34 : vector<4x8x8xf32>
    %36 = math.exp %35 : vector<4x8x8xf32>
    %cst_28 = arith.constant dense<0.000000e+00> : vector<4x8xf32>
    %37 = vector.multi_reduction <add>, %36, %cst_28 [2] : vector<4x8x8xf32> to vector<4x8xf32>
    %38 = vector.shape_cast %37 : vector<4x8xf32> to vector<4x8x1xf32>
    %39 = tpu.reciprocal %38 : vector<4x8x1xf32> -> vector<4x8x1xf32>
    %40 = vector.broadcast %39 : vector<4x8x1xf32> to vector<4x8x8xf32>
    %41 = arith.mulf %36, %40 : vector<4x8x8xf32>
    %c0_29 = arith.constant 0 : index
    %c0_30 = arith.constant 0 : index
    %c0_31 = arith.constant 0 : index
    %c0_32 = arith.constant 0 : index
    %42 = vector.load %arg16[%c0_29, %c0_30, %c0_31, %c0_32] : memref<1x4x8x8xf32, #tpu.memory_space<vmem>>, vector<1x4x8x8xf32>
    %43 = vector.shape_cast %42 : vector<1x4x8x8xf32> to vector<4x8x8xf32>
    %44 = vector.shape_cast %41 : vector<4x8x8xf32> to vector<1x4x8x8xf32>
    tpu.vector_store %arg16[%c0_29, %c0_30, %c0_31, %c0_32], %44 {strides = array<i32>} : memref<1x4x8x8xf32, #tpu.memory_space<vmem>>, vector<1x4x8x8xf32>,
    "tpu.trace_start"() <{level = 10 : i32, message = "hqk,hkd->hqd"}> : () -> ()
    %cst_33 = arith.constant dense<0.000000e+00> : vector<4x8x8xf32>
    %45 = tpu.matmul %41, %30, %cst_33 {dimension_numbers = #tpu.dot_dimension_numbers<[2], [1], [1], [2], [0, 0, 0, 1, 1, 2], [0], [0]>} : vector<4x8x8xf32>, vector<4x8x8xf32>, vector<4x8x8xf32> -> vector<4x8x8xf32>
    "tpu.trace_stop"() : () -> ()
    %46 = vector.extract_strided_slice %45 {offsets = [0, 0, 0], sizes = [1, 8, 8], strides = [1, 1, 1]} : vector<4x8x8xf32> to vector<1x8x8xf32>
    %47 = vector.shape_cast %46 : vector<1x8x8xf32> to vector<8x8xf32>
    %c0_34 = arith.constant 0 : index
    %c0_35 = arith.constant 0 : index
    %48 = vector.load %arg20[%c0_34, %c0_35] : memref<8x32xf32, #tpu.memory_space<vmem>>, vector<8x8xf32>
    tpu.vector_store %arg20[%c0_34, %c0_35], %47 {strides = array<i32>} : memref<8x32xf32, #tpu.memory_space<vmem>>, vector<8x8xf32>,
    %49 = vector.extract_strided_slice %45 {offsets = [1, 0, 0], sizes = [1, 8, 8], strides = [1, 1, 1]} : vector<4x8x8xf32> to vector<1x8x8xf32>
    %50 = vector.shape_cast %49 : vector<1x8x8xf32> to vector<8x8xf32>
    %c0_36 = arith.constant 0 : index
    %c8 = arith.constant 8 : index
    %51 = vector.load %arg20[%c0_36, %c8] : memref<8x32xf32, #tpu.memory_space<vmem>>, vector<8x8xf32>
    tpu.vector_store %arg20[%c0_36, %c8], %50 {strides = array<i32>} : memref<8x32xf32, #tpu.memory_space<vmem>>, vector<8x8xf32>,
    %52 = vector.extract_strided_slice %45 {offsets = [2, 0, 0], sizes = [1, 8, 8], strides = [1, 1, 1]} : vector<4x8x8xf32> to vector<1x8x8xf32>
    %53 = vector.shape_cast %52 : vector<1x8x8xf32> to vector<8x8xf32>
    %c0_37 = arith.constant 0 : index
    %c16 = arith.constant 16 : index
    %54 = vector.load %arg20[%c0_37, %c16] : memref<8x32xf32, #tpu.memory_space<vmem>>, vector<8x8xf32>
    tpu.vector_store %arg20[%c0_37, %c16], %53 {strides = array<i32>} : memref<8x32xf32, #tpu.memory_space<vmem>>, vector<8x8xf32>,
    %55 = vector.extract_strided_slice %45 {offsets = [3, 0, 0], sizes = [1, 8, 8], strides = [1, 1, 1]} : vector<4x8x8xf32> to vector<1x8x8xf32>
    %56 = vector.shape_cast %55 : vector<1x8x8xf32> to vector<8x8xf32>
    %c0_38 = arith.constant 0 : index
    %c24 = arith.constant 24 : index
    %57 = vector.load %arg20[%c0_38, %c24] : memref<8x32xf32, #tpu.memory_space<vmem>>, vector<8x8xf32>
    tpu.vector_store %arg20[%c0_38, %c24], %56 {strides = array<i32>} : memref<8x32xf32, #tpu.memory_space<vmem>>, vector<8x8xf32>,
    %c0_39 = arith.constant 0 : index
    %c0_40 = arith.constant 0 : index
    %58 = vector.load %arg20[%c0_39, %c0_40] : memref<8x32xf32, #tpu.memory_space<vmem>>, vector<8x32xf32>
    %c0_41 = arith.constant 0 : index
    %c0_42 = arith.constant 0 : index
    %59 = vector.load %arg11[%c0_41, %c0_42] : memref<32x32xf32, #tpu.memory_space<vmem>>, vector<32x32xf32>
    %cst_43 = arith.constant dense<0.000000e+00> : vector<8x32xf32>
    %60 = tpu.matmul %58, %59, %cst_43 {dimension_numbers = #tpu.dot_dimension_numbers<[1], [0], [0], [1], [0, 0, 1, 1], [], []>} : vector<8x32xf32>, vector<32x32xf32>, vector<8x32xf32> -> vector<8x32xf32>
    %c0_44 = arith.constant 0 : index
    %c0_45 = arith.constant 0 : index
    %61 = vector.load %arg12[%c0_44, %c0_45] : memref<1x32xf32, #tpu.memory_space<vmem>>, vector<1x32xf32>
    %62 = vector.broadcast %61 : vector<1x32xf32> to vector<8x32xf32>
    %63 = arith.addf %60, %62 : vector<8x32xf32>
    %64 = arith.addf %4, %63 : vector<8x32xf32>
    %cst_46 = arith.constant dense<0.000000e+00> : vector<8xf32>
    %65 = vector.multi_reduction <add>, %64, %cst_46 [1] : vector<8x32xf32> to vector<8xf32>
    %66 = vector.shape_cast %65 : vector<8xf32> to vector<8x1xf32>
    %cst_47 = arith.constant 3.200000e+01 : f32
    %67 = vector.broadcast %cst_47 : f32 to vector<8x1xf32>
    %68 = arith.divf %66, %67 : vector<8x1xf32>
    %69 = vector.broadcast %68 : vector<8x1xf32> to vector<8x32xf32>
    %70 = arith.subf %64, %69 : vector<8x32xf32>
    %71 = arith.mulf %70, %70 : vector<8x32xf32>
    %cst_48 = arith.constant dense<0.000000e+00> : vector<8xf32>
    %72 = vector.multi_reduction <add>, %71, %cst_48 [1] : vector<8x32xf32> to vector<8xf32>
    %73 = vector.shape_cast %72 : vector<8xf32> to vector<8x1xf32>
    %cst_49 = arith.constant 3.200000e+01 : f32
    %74 = vector.broadcast %cst_49 : f32 to vector<8x1xf32>
    %75 = arith.divf %73, %74 : vector<8x1xf32>
    %76 = vector.broadcast %68 : vector<8x1xf32> to vector<8x32xf32>
    %77 = arith.subf %64, %76 : vector<8x32xf32>
    %cst_50 = arith.constant 9.99999974E-6 : f32
    %78 = vector.broadcast %cst_50 : f32 to vector<8x1xf32>
    %79 = arith.addf %75, %78 : vector<8x1xf32>
    %80 = math.rsqrt %79 : vector<8x1xf32>
    %81 = vector.broadcast %80 : vector<8x1xf32> to vector<8x32xf32>
    %82 = arith.mulf %77, %81 : vector<8x32xf32>
    %c0_51 = arith.constant 0 : index
    %c0_52 = arith.constant 0 : index
    %83 = vector.load %arg13[%c0_51, %c0_52] : memref<1x32xf32, #tpu.memory_space<vmem>>, vector<1x32xf32>
    %84 = vector.broadcast %83 : vector<1x32xf32> to vector<8x32xf32>
    %85 = arith.mulf %82, %84 : vector<8x32xf32>
    %c0_53 = arith.constant 0 : index
    %c0_54 = arith.constant 0 : index
    %86 = vector.load %arg14[%c0_53, %c0_54] : memref<1x32xf32, #tpu.memory_space<vmem>>, vector<1x32xf32>
    %87 = vector.broadcast %86 : vector<1x32xf32> to vector<8x32xf32>
    %88 = arith.addf %85, %87 : vector<8x32xf32>
    %c0_55 = arith.constant 0 : index
    %c0_56 = arith.constant 0 : index
    %c0_57 = arith.constant 0 : index
    %89 = vector.load %arg15[%c0_55, %c0_56, %c0_57] : memref<1x8x32xf32, #tpu.memory_space<vmem>>, vector<1x8x32xf32>
    %90 = vector.shape_cast %89 : vector<1x8x32xf32> to vector<8x32xf32>
    %91 = vector.shape_cast %88 : vector<8x32xf32> to vector<1x8x32xf32>
    tpu.vector_store %arg15[%c0_55, %c0_56, %c0_57], %91 {strides = array<i32>} : memref<1x8x32xf32, #tpu.memory_space<vmem>>, vector<1x8x32xf32>,
    return
  }
  func.func @transform_0(%arg0: i32, %arg1: i32) -> (i32, i32, i32) {
    %c0_i32 = arith.constant 0 : i32
    %c0_i32_0 = arith.constant 0 : i32
    return %arg0, %arg1, %c0_i32 : i32, i32, i32
  }
  func.func @transform_1(%arg0: i32, %arg1: i32) -> (i32, i32, i32) {
    %c0_i32 = arith.constant 0 : i32
    %c0_i32_0 = arith.constant 0 : i32
    %c0_i32_1 = arith.constant 0 : i32
    return %arg0, %c0_i32, %c0_i32_0 : i32, i32, i32
  }
  func.func @transform_2(%arg0: i32, %arg1: i32) -> (i32, i32, i32) {
    %c0_i32 = arith.constant 0 : i32
    %c0_i32_0 = arith.constant 0 : i32
    %c0_i32_1 = arith.constant 0 : i32
    return %arg0, %c0_i32, %c0_i32_0 : i32, i32, i32
  }
  func.func @transform_3(%arg0: i32, %arg1: i32) -> (i32, i32) {
    %c0_i32 = arith.constant 0 : i32
    %c0_i32_0 = arith.constant 0 : i32
    %c0_i32_1 = arith.constant 0 : i32
    return %c0_i32, %c0_i32_0 : i32, i32
  }
  func.func @transform_4(%arg0: i32, %arg1: i32) -> (i32, i32) {
    %c0_i32 = arith.constant 0 : i32
    %c0_i32_0 = arith.constant 0 : i32
    %c0_i32_1 = arith.constant 0 : i32
    return %c0_i32, %c0_i32_0 : i32, i32
  }
  func.func @transform_5(%arg0: i32, %arg1: i32) -> (i32, i32) {
    %c0_i32 = arith.constant 0 : i32
    %c0_i32_0 = arith.constant 0 : i32
    %c0_i32_1 = arith.constant 0 : i32
    return %c0_i32, %c0_i32_0 : i32, i32
  }
  func.func @transform_6(%arg0: i32, %arg1: i32) -> (i32, i32) {
    %c0_i32 = arith.constant 0 : i32
    %c0_i32_0 = arith.constant 0 : i32
    %c0_i32_1 = arith.constant 0 : i32
    return %c0_i32, %c0_i32_0 : i32, i32
  }
  func.func @transform_7(%arg0: i32, %arg1: i32) -> (i32, i32) {
    %c0_i32 = arith.constant 0 : i32
    %c0_i32_0 = arith.constant 0 : i32
    %c0_i32_1 = arith.constant 0 : i32
    return %c0_i32, %c0_i32_0 : i32, i32
  }
  func.func @transform_8(%arg0: i32, %arg1: i32) -> (i32, i32) {
    %c0_i32 = arith.constant 0 : i32
    %c0_i32_0 = arith.constant 0 : i32
    %c0_i32_1 = arith.constant 0 : i32
    return %c0_i32, %c0_i32_0 : i32, i32
  }
  func.func @transform_9(%arg0: i32, %arg1: i32) -> (i32, i32) {
    %c0_i32 = arith.constant 0 : i32
    %c0_i32_0 = arith.constant 0 : i32
    %c0_i32_1 = arith.constant 0 : i32
    return %c0_i32, %c0_i32_0 : i32, i32
  }
  func.func @transform_10(%arg0: i32, %arg1: i32) -> (i32, i32) {
    %c0_i32 = arith.constant 0 : i32
    %c0_i32_0 = arith.constant 0 : i32
    %c0_i32_1 = arith.constant 0 : i32
    return %c0_i32, %c0_i32_0 : i32, i32
  }
  func.func @transform_11(%arg0: i32, %arg1: i32) -> (i32, i32) {
    %c0_i32 = arith.constant 0 : i32
    %c0_i32_0 = arith.constant 0 : i32
    %c0_i32_1 = arith.constant 0 : i32
    return %c0_i32, %c0_i32_0 : i32, i32
  }
  func.func @transform_12(%arg0: i32, %arg1: i32) -> (i32, i32) {
    %c0_i32 = arith.constant 0 : i32
    %c0_i32_0 = arith.constant 0 : i32
    %c0_i32_1 = arith.constant 0 : i32
    return %c0_i32, %c0_i32_0 : i32, i32
  }
  func.func @transform_13(%arg0: i32, %arg1: i32) -> (i32, i32, i32) {
    %c0_i32 = arith.constant 0 : i32
    %c0_i32_0 = arith.constant 0 : i32
    return %arg0, %arg1, %c0_i32 : i32, i32, i32
  }
  func.func @transform_14(%arg0: i32, %arg1: i32) -> (i32, i32, i32, i32) {
    %c0_i32 = arith.constant 0 : i32
    %c0_i32_0 = arith.constant 0 : i32
    %c0_i32_1 = arith.constant 0 : i32
    return %arg0, %c0_i32, %arg1, %c0_i32_0 : i32, i32, i32, i32
  }
}

</mosaic_0001>

<llo_original>
// kernel: tpu_custom_call.1
$region0: #{tpu_custom_call.1}
  #allocation0 [shape = 'u32[]', space=smem, size = 0x4, offset = 0x4, fixed_abs, tag = 'smem constant byte address 0x4 - core index']
  #allocation1 [shape = 'u32[144,128]{1,0:T(1,128)}', space=vmem, size = 0x12000, scoped, tag = 'internal scratch']
  #allocation2 [shape = 'f32[4,8,8]{2,1,0:T(8,128)}', space=vmem, size = 0x4000, scoped, tag = 'scratch operand']
  #allocation3 [shape = 'f32[4,8,8]{2,1,0:T(8,128)}', space=vmem, size = 0x4000, scoped, tag = 'scratch operand']
  #allocation4 [shape = 'f32[4,8,8]{2,1,0:T(8,128)}', space=vmem, size = 0x4000, scoped, tag = 'scratch operand']
  #allocation5 [shape = 'f32[8,32]{1,0:T(8,128)}', space=vmem, size = 0x1000, scoped, tag = 'scratch operand']
  %s0 = inlined_call_operand.hbm [shape: f32[2,8,32], index: 0, kind: input, shape index: {}]
  %s1 = inlined_call_operand.hbm [shape: f32[2,8,32], index: 1, kind: input, shape index: {}]
  %s2 = inlined_call_operand.hbm [shape: f32[2,8,32], index: 2, kind: input, shape index: {}]
  %s3 = inlined_call_operand.hbm [shape: f32[32,32], index: 3, kind: input, shape index: {}]
  %s4 = inlined_call_operand.vmem [shape: f32[1,32], index: 4, kind: input, shape index: {}]
  %s5 = inlined_call_operand.hbm [shape: f32[32,32], index: 5, kind: input, shape index: {}]
  %s6 = inlined_call_operand.vmem [shape: f32[1,32], index: 6, kind: input, shape index: {}]
  %s7 = inlined_call_operand.hbm [shape: f32[32,32], index: 7, kind: input, shape index: {}]
  %s8 = inlined_call_operand.hbm [shape: f32[1,32], index: 8, kind: input, shape index: {}]
  %s9 = inlined_call_operand.vmem [shape: f32[32,32], index: 9, kind: input, shape index: {}]
  %s10 = inlined_call_operand.vmem [shape: f32[1,32], index: 10, kind: input, shape index: {}]
  %s11 = inlined_call_operand.vmem [shape: f32[1,32], index: 11, kind: input, shape index: {}]
  %s12 = inlined_call_operand.vmem [shape: f32[1,32], index: 12, kind: input, shape index: {}]
  %s13 = inlined_call_operand.hbm [shape: f32[2,8,32], index: 13, kind: output, shape index: {0}]
  %s14 = inlined_call_operand.hbm [shape: f32[2,4,8,8], index: 14, kind: output, shape index: {1}]
  %15 = xla_tuple %s13, %s14
  %s16 = sld [smem:[#allocation0]]
  $region125: #{tpu_custom_call.1} parent=0
    _
  %s18 = ssub.s32 1, %s16
  %s19 = scalar_select 0, %s18, %s16
  $region1: #{tpu_custom_call.1} parent=0
    #allocation6 [shape = 'u8[8192]{0}', space=vmem, size = 0x2000, scoped, tag = 'input window, operand 0']
    #allocation7 [shape = 's32[2]{0}', space=sflag, size = 0x8, scoped, tag = 'scoped memory for tpu_custom_call.1']
    #allocation8 [shape = 's32[2]{0}', space=sflag, size = 0x8, scoped, tag = 'scoped memory for tpu_custom_call.1']
    #allocation9 [shape = 'u8[8192]{0}', space=vmem, size = 0x2000, scoped, tag = 'input window, operand 1']
    #allocation10 [shape = 's32[2]{0}', space=sflag, size = 0x8, scoped, tag = 'scoped memory for tpu_custom_call.1']
    #allocation11 [shape = 'u8[8192]{0}', space=vmem, size = 0x2000, scoped, tag = 'input window, operand 2']
    #allocation12 [shape = 'u8[16384]{0}', space=vmem, size = 0x4000, scoped, tag = 'input window, operand 3, single buffered']
    #allocation13 [shape = 's32[1]{0}', space=sflag, size = 0x4, scoped, tag = 'scoped memory for tpu_custom_call.1']
    #allocation14 [shape = 'u8[16384]{0}', space=vmem, size = 0x4000, scoped, tag = 'input window, operand 5, single buffered']
    #allocation15 [shape = 'u8[16384]{0}', space=vmem, size = 0x4000, scoped, tag = 'input window, operand 7, single buffered']
    #allocation16 [shape = 's32[1]{0}', space=sflag, size = 0x4, scoped, tag = 'scoped memory for tpu_custom_call.1']
    #allocation17 [shape = 'u8[512]{0}', space=vmem, size = 0x400, scoped, tag = 'input window, operand 8, single buffered']
    #allocation18 [shape = 'u8[8192]{0}', space=vmem, size = 0x2000, scoped, tag = 'output window, operand 0']
    #allocation19 [shape = 'u8[32768]{0}', space=vmem, size = 0x8000, scoped, tag = 'output window, operand 1']
    #allocation20 [shape = 's32[2]{0}', space=sflag, size = 0x8, scoped, tag = 'scoped memory for tpu_custom_call.1']
    %20 = vsyncpa [#allocation7], 0
    %s21 = scalar_lea.sflag [#allocation7], 1
    %22 = vsyncpa %s21, 0
    %23 = vsyncpa [#allocation10], 0
    %s24 = scalar_lea.sflag [#allocation10], 1
    %25 = vsyncpa %s24, 0
    %26 = vsyncpa [#allocation13], 0
    %27 = vsyncpa [#allocation16], 0
    %28 = vsyncpa [#allocation8], 0
    %s29 = scalar_lea.sflag [#allocation8], 1
    %30 = vsyncpa %s29, 0
    %31 = vsyncpa [#allocation20], 0
    %s32 = scalar_lea.sflag [#allocation20], 1
    %33 = vsyncpa %s32, 0
    loop: start=0, step=1, limit=4
    $region2: #{tpu_custom_call.1} parent=1 // loop_pre_header
      _
    $region3: #{tpu_custom_call.1} parent=1 // loop_header
      %s35 = sphi 0, %s39
      %p36 = scmp.ge.s32.totalorder %s35, 4
      %s42 = sphi 0, %s54
      %s43 = sphi 0, %s50
      %s44 = sphi 0, %s42
      %s45 = sphi 0, %s43
      %s46 = sphi 0, %s44
      %s47 = sphi 0, %s45
      %s59 = sphi 0, %s61
      %s62 = sphi 0, %s59
      %s63 = sphi 0, %s62
      %s79 = sphi 0, %s63
      %s85 = sphi 0, %s87
      %s88 = sphi 0, %s85
      %s89 = sphi 0, %s88
      %s105 = sphi 0, %s89
      %s111 = sphi 0, %s113
      %s114 = sphi 0, %s111
      %s115 = sphi 0, %s114
      %s131 = sphi 0, %s115
      %s135 = sphi 0, %s135
      %s137 = sphi 0, %s135
      %s138 = sphi 0, %s137
      %s152 = sphi 0, %s138
      %s156 = sphi 0, %s156
      %s158 = sphi 0, %s156
      %s159 = sphi 0, %s158
      %s173 = sphi 0, %s159
      %s177 = sphi 0, %s177
      %s179 = sphi 0, %s177
      %s180 = sphi 0, %s179
      %s194 = sphi 0, %s180
      %s198 = sphi 0, %s198
      %s200 = sphi 0, %s198
      %s201 = sphi 0, %s200
      %s215 = sphi 0, %s201
      %s219 = sphi 0, %s219
      %s221 = sphi 0, %s219
      %s222 = sphi 0, %s221
      %s236 = sphi 0, %s222
      %s240 = sphi 0, %s240
      %s242 = sphi 0, %s240
      %s243 = sphi 0, %s242
      %s257 = sphi 0, %s243
      %s261 = sphi 0, %s261
      %s263 = sphi 0, %s261
      %s264 = sphi 0, %s263
      %s278 = sphi 0, %s264
      %s282 = sphi 0, %s282
      %s284 = sphi 0, %s282
      %s285 = sphi 0, %s284
      %s299 = sphi 0, %s285
      %s303 = sphi 0, %s303
      %s305 = sphi 0, %s303
      %s306 = sphi 0, %s305
      %s320 = sphi 0, %s306
      %s324 = sphi 0, %s324
      %s326 = sphi 0, %s324
      %s327 = sphi 0, %s326
      %s341 = sphi 0, %s327
      %s349 = sphi 0, %s351
      %s352 = sphi 0, %s349
      %s353 = sphi 0, %s352
      %s369 = sphi 0, %s353
      %s377 = sphi 0, %s379
      %s380 = sphi 0, %s377
      %s381 = sphi 0, %s380
      %s397 = sphi 0, %s381
    $region4: #{tpu_custom_call.1} parent=1 // loop_header_branch
      %38 = sbr.rel (%p36) target = $region8
    $region5: #{tpu_custom_call.1} parent=1 // loop_body
      %s40 = ssub.s32 %s35, 1
      %s41 = ssub.s32 %s35, 2
      %s48 = sadd.s32 1, %s43
      %p49 = scmp.ge.s32.totalorder %s48, 1
      %s50 = scalar_select %p49, 0, %s48
      %s51 = sadd.s32 1, %s42
      %s52 = scalar_select %p49, %s51, %s42
      %p53 = scmp.ge.s32.totalorder %s52, 2
      %s54 = scalar_select %p53, 0, %s52
      %s55 = ssub.s32 %s42, %s54
      %s56 = ssub.s32 %s43, %s50
      %s57 = sor.u32 %s55, %s56
      %p58 = scmp.eq.s32.totalorder %s57, 0
      %s60 = sadd.s32 %s59, 1
      %s61 = scalar_select %p58, %s59, %s60
      %p64 = pneg %p58
      %p65 = scmp.eq.s32.totalorder %s35, 1
      %p66 = por %p64, %p65
      %p67 = scmp.ne.s32.totalorder %s59, %s62
      %p68 = scmp.eq.s32.totalorder %s35, 0
      %p69 = por %p67, %p68
      %p70 = scmp.ne.s32.totalorder %s59, %s62
      %p71 = scmp.eq.s32.totalorder %s40, 1
      %p72 = por %p70, %p71
      %p73 = scmp.ne.s32.totalorder %s62, %s63
      %p74 = scmp.eq.s32.totalorder %s40, 0
      %p75 = por %p73, %p74
      %p76 = scmp.ne.s32.totalorder %s62, %s63
      %p77 = scmp.eq.s32.totalorder %s41, 1
      %p78 = por %p76, %p77
      %p80 = scmp.ne.s32.totalorder %s63, %s79
      %p81 = scmp.eq.s32.totalorder %s41, 0
      %p82 = por %p80, %p81
      %s83 = ssub.s32 %s42, %s54
      %p84 = scmp.eq.s32.totalorder %s83, 0
      %s86 = sadd.s32 %s85, 1
      %s87 = scalar_select %p84, %s85, %s86
      %p90 = pneg %p84
      %p91 = scmp.eq.s32.totalorder %s35, 1
      %p92 = por %p90, %p91
      %p93 = scmp.ne.s32.totalorder %s85, %s88
      %p94 = scmp.eq.s32.totalorder %s35, 0
      %p95 = por %p93, %p94
      %p96 = scmp.ne.s32.totalorder %s85, %s88
      %p97 = scmp.eq.s32.totalorder %s40, 1
      %p98 = por %p96, %p97
      %p99 = scmp.ne.s32.totalorder %s88, %s89
      %p100 = scmp.eq.s32.totalorder %s40, 0
      %p101 = por %p99, %p100
      %p102 = scmp.ne.s32.totalorder %s88, %s89
      %p103 = scmp.eq.s32.totalorder %s41, 1
      %p104 = por %p102, %p103
      %p106 = scmp.ne.s32.totalorder %s89, %s105
      %p107 = scmp.eq.s32.totalorder %s41, 0
      %p108 = por %p106, %p107
      %s109 = ssub.s32 %s42, %s54
      %p110 = scmp.eq.s32.totalorder %s109, 0
      %s112 = sadd.s32 %s111, 1
      %s113 = scalar_select %p110, %s111, %s112
      %p116 = pneg %p110
      %p117 = scmp.eq.s32.totalorder %s35, 1
      %p118 = por %p116, %p117
      %p119 = scmp.ne.s32.totalorder %s111, %s114
      %p120 = scmp.eq.s32.totalorder %s35, 0
      %p121 = por %p119, %p120
      %p122 = scmp.ne.s32.totalorder %s111, %s114
      %p123 = scmp.eq.s32.totalorder %s40, 1
      %p124 = por %p122, %p123
      %p125 = scmp.ne.s32.totalorder %s114, %s115
      %p126 = scmp.eq.s32.totalorder %s40, 0
      %p127 = por %p125, %p126
      %p128 = scmp.ne.s32.totalorder %s114, %s115
      %p129 = scmp.eq.s32.totalorder %s41, 1
      %p130 = por %p128, %p129
      %p132 = scmp.ne.s32.totalorder %s115, %s131
      %p133 = scmp.eq.s32.totalorder %s41, 0
      %p134 = por %p132, %p133
      %s136 = sadd.s32 %s135, 1
      %p139 = scmp.eq.s32.totalorder %s35, 1
      %p140 = scmp.ne.s32.totalorder %s135, %s137
      %p141 = scmp.eq.s32.totalorder %s35, 0
      %p142 = por %p140, %p141
      %p143 = scmp.ne.s32.totalorder %s135, %s137
      %p144 = scmp.eq.s32.totalorder %s40, 1
      %p145 = por %p143, %p144
      %p146 = scmp.ne.s32.totalorder %s137, %s138
      %p147 = scmp.eq.s32.totalorder %s40, 0
      %p148 = por %p146, %p147
      %p149 = scmp.ne.s32.totalorder %s137, %s138
      %p150 = scmp.eq.s32.totalorder %s41, 1
      %p151 = por %p149, %p150
      %p153 = scmp.ne.s32.totalorder %s138, %s152
      %p154 = scmp.eq.s32.totalorder %s41, 0
      %p155 = por %p153, %p154
      %s157 = sadd.s32 %s156, 1
      %p160 = scmp.eq.s32.totalorder %s35, 1
      %p161 = scmp.ne.s32.totalorder %s156, %s158
      %p162 = scmp.eq.s32.totalorder %s35, 0
      %p163 = por %p161, %p162
      %p164 = scmp.ne.s32.totalorder %s156, %s158
      %p165 = scmp.eq.s32.totalorder %s40, 1
      %p166 = por %p164, %p165
      %p167 = scmp.ne.s32.totalorder %s158, %s159
      %p168 = scmp.eq.s32.totalorder %s40, 0
      %p169 = por %p167, %p168
      %p170 = scmp.ne.s32.totalorder %s158, %s159
      %p171 = scmp.eq.s32.totalorder %s41, 1
      %p172 = por %p170, %p171
      %p174 = scmp.ne.s32.totalorder %s159, %s173
      %p175 = scmp.eq.s32.totalorder %s41, 0
      %p176 = por %p174, %p175
      %s178 = sadd.s32 %s177, 1
      %p181 = scmp.eq.s32.totalorder %s35, 1
      %p182 = scmp.ne.s32.totalorder %s177, %s179
      %p183 = scmp.eq.s32.totalorder %s35, 0
      %p184 = por %p182, %p183
      %p185 = scmp.ne.s32.totalorder %s177, %s179
      %p186 = scmp.eq.s32.totalorder %s40, 1
      %p187 = por %p185, %p186
      %p188 = scmp.ne.s32.totalorder %s179, %s180
      %p189 = scmp.eq.s32.totalorder %s40, 0
      %p190 = por %p188, %p189
      %p191 = scmp.ne.s32.totalorder %s179, %s180
      %p192 = scmp.eq.s32.totalorder %s41, 1
      %p193 = por %p191, %p192
      %p195 = scmp.ne.s32.totalorder %s180, %s194
      %p196 = scmp.eq.s32.totalorder %s41, 0
      %p197 = por %p195, %p196
      %s199 = sadd.s32 %s198, 1
      %p202 = scmp.eq.s32.totalorder %s35, 1
      %p203 = scmp.ne.s32.totalorder %s198, %s200
      %p204 = scmp.eq.s32.totalorder %s35, 0
      %p205 = por %p203, %p204
      %p206 = scmp.ne.s32.totalorder %s198, %s200
      %p207 = scmp.eq.s32.totalorder %s40, 1
      %p208 = por %p206, %p207
      %p209 = scmp.ne.s32.totalorder %s200, %s201
      %p210 = scmp.eq.s32.totalorder %s40, 0
      %p211 = por %p209, %p210
      %p212 = scmp.ne.s32.totalorder %s200, %s201
      %p213 = scmp.eq.s32.totalorder %s41, 1
      %p214 = por %p212, %p213
      %p216 = scmp.ne.s32.totalorder %s201, %s215
      %p217 = scmp.eq.s32.totalorder %s41, 0
      %p218 = por %p216, %p217
      %s220 = sadd.s32 %s219, 1
      %p223 = scmp.eq.s32.totalorder %s35, 1
      %p224 = scmp.ne.s32.totalorder %s219, %s221
      %p225 = scmp.eq.s32.totalorder %s35, 0
      %p226 = por %p224, %p225
      %p227 = scmp.ne.s32.totalorder %s219, %s221
      %p228 = scmp.eq.s32.totalorder %s40, 1
      %p229 = por %p227, %p228
      %p230 = scmp.ne.s32.totalorder %s221, %s222
      %p231 = scmp.eq.s32.totalorder %s40, 0
      %p232 = por %p230, %p231
      %p233 = scmp.ne.s32.totalorder %s221, %s222
      %p234 = scmp.eq.s32.totalorder %s41, 1
      %p235 = por %p233, %p234
      %p237 = scmp.ne.s32.totalorder %s222, %s236
      %p238 = scmp.eq.s32.totalorder %s41, 0
      %p239 = por %p237, %p238
      %s241 = sadd.s32 %s240, 1
      %p244 = scmp.eq.s32.totalorder %s35, 1
      %p245 = scmp.ne.s32.totalorder %s240, %s242
      %p246 = scmp.eq.s32.totalorder %s35, 0
      %p247 = por %p245, %p246
      %p248 = scmp.ne.s32.totalorder %s240, %s242
      %p249 = scmp.eq.s32.totalorder %s40, 1
      %p250 = por %p248, %p249
      %p251 = scmp.ne.s32.totalorder %s242, %s243
      %p252 = scmp.eq.s32.totalorder %s40, 0
      %p253 = por %p251, %p252
      %p254 = scmp.ne.s32.totalorder %s242, %s243
      %p255 = scmp.eq.s32.totalorder %s41, 1
      %p256 = por %p254, %p255
      %p258 = scmp.ne.s32.totalorder %s243, %s257
      %p259 = scmp.eq.s32.totalorder %s41, 0
      %p260 = por %p258, %p259
      %s262 = sadd.s32 %s261, 1
      %p265 = scmp.eq.s32.totalorder %s35, 1
      %p266 = scmp.ne.s32.totalorder %s261, %s263
      %p267 = scmp.eq.s32.totalorder %s35, 0
      %p268 = por %p266, %p267
      %p269 = scmp.ne.s32.totalorder %s261, %s263
      %p270 = scmp.eq.s32.totalorder %s40, 1
      %p271 = por %p269, %p270
      %p272 = scmp.ne.s32.totalorder %s263, %s264
      %p273 = scmp.eq.s32.totalorder %s40, 0
      %p274 = por %p272, %p273
      %p275 = scmp.ne.s32.totalorder %s263, %s264
      %p276 = scmp.eq.s32.totalorder %s41, 1
      %p277 = por %p275, %p276
      %p279 = scmp.ne.s32.totalorder %s264, %s278
      %p280 = scmp.eq.s32.totalorder %s41, 0
      %p281 = por %p279, %p280
      %s283 = sadd.s32 %s282, 1
      %p286 = scmp.eq.s32.totalorder %s35, 1
      %p287 = scmp.ne.s32.totalorder %s282, %s284
      %p288 = scmp.eq.s32.totalorder %s35, 0
      %p289 = por %p287, %p288
      %p290 = scmp.ne.s32.totalorder %s282, %s284
      %p291 = scmp.eq.s32.totalorder %s40, 1
      %p292 = por %p290, %p291
      %p293 = scmp.ne.s32.totalorder %s284, %s285
      %p294 = scmp.eq.s32.totalorder %s40, 0
      %p295 = por %p293, %p294
      %p296 = scmp.ne.s32.totalorder %s284, %s285
      %p297 = scmp.eq.s32.totalorder %s41, 1
      %p298 = por %p296, %p297
      %p300 = scmp.ne.s32.totalorder %s285, %s299
      %p301 = scmp.eq.s32.totalorder %s41, 0
      %p302 = por %p300, %p301
      %s304 = sadd.s32 %s303, 1
      %p307 = scmp.eq.s32.totalorder %s35, 1
      %p308 = scmp.ne.s32.totalorder %s303, %s305
      %p309 = scmp.eq.s32.totalorder %s35, 0
      %p310 = por %p308, %p309
      %p311 = scmp.ne.s32.totalorder %s303, %s305
      %p312 = scmp.eq.s32.totalorder %s40, 1
      %p313 = por %p311, %p312
      %p314 = scmp.ne.s32.totalorder %s305, %s306
      %p315 = scmp.eq.s32.totalorder %s40, 0
      %p316 = por %p314, %p315
      %p317 = scmp.ne.s32.totalorder %s305, %s306
      %p318 = scmp.eq.s32.totalorder %s41, 1
      %p319 = por %p317, %p318
      %p321 = scmp.ne.s32.totalorder %s306, %s320
      %p322 = scmp.eq.s32.totalorder %s41, 0
      %p323 = por %p321, %p322
      %s325 = sadd.s32 %s324, 1
      %p328 = scmp.eq.s32.totalorder %s35, 1
      %p329 = scmp.ne.s32.totalorder %s324, %s326
      %p330 = scmp.eq.s32.totalorder %s35, 0
      %p331 = por %p329, %p330
      %p332 = scmp.ne.s32.totalorder %s324, %s326
      %p333 = scmp.eq.s32.totalorder %s40, 1
      %p334 = por %p332, %p333
      %p335 = scmp.ne.s32.totalorder %s326, %s327
      %p336 = scmp.eq.s32.totalorder %s40, 0
      %p337 = por %p335, %p336
      %p338 = scmp.ne.s32.totalorder %s326, %s327
      %p339 = scmp.eq.s32.totalorder %s41, 1
      %p340 = por %p338, %p339
      %p342 = scmp.ne.s32.totalorder %s327, %s341
      %p343 = scmp.eq.s32.totalorder %s41, 0
      %p344 = por %p342, %p343
      %s345 = ssub.s32 %s42, %s54
      %s346 = ssub.s32 %s43, %s50
      %s347 = sor.u32 %s345, %s346
      %p348 = scmp.eq.s32.totalorder %s347, 0
      %s350 = sadd.s32 %s349, 1
      %s351 = scalar_select %p348, %s349, %s350
      %p354 = pneg %p348
      %p355 = scmp.eq.s32.totalorder %s35, 1
      %p356 = por %p354, %p355
      %p357 = scmp.ne.s32.totalorder %s349, %s352
      %p358 = scmp.eq.s32.totalorder %s35, 0
      %p359 = por %p357, %p358
      %p360 = scmp.ne.s32.totalorder %s349, %s352
      %p361 = scmp.eq.s32.totalorder %s40, 1
      %p362 = por %p360, %p361
      %p363 = scmp.ne.s32.totalorder %s352, %s353
      %p364 = scmp.eq.s32.totalorder %s40, 0
      %p365 = por %p363, %p364
      %p366 = scmp.ne.s32.totalorder %s352, %s353
      %p367 = scmp.eq.s32.totalorder %s41, 1
      %p368 = por %p366, %p367
      %p370 = scmp.ne.s32.totalorder %s353, %s369
      %p371 = scmp.eq.s32.totalorder %s41, 0
      %p372 = por %p370, %p371
      %s373 = ssub.s32 %s42, %s54
      %s374 = ssub.s32 %s43, %s50
      %s375 = sor.u32 %s373, %s374
      %p376 = scmp.eq.s32.totalorder %s375, 0
      %s378 = sadd.s32 %s377, 1
      %s379 = scalar_select %p376, %s377, %s378
      %p382 = pneg %p376
      %p383 = scmp.eq.s32.totalorder %s35, 1
      %p384 = por %p382, %p383
      %p385 = scmp.ne.s32.totalorder %s377, %s380
      %p386 = scmp.eq.s32.totalorder %s35, 0
      %p387 = por %p385, %p386
      %p388 = scmp.ne.s32.totalorder %s377, %s380
      %p389 = scmp.eq.s32.totalorder %s40, 1
      %p390 = por %p388, %p389
      %p391 = scmp.ne.s32.totalorder %s380, %s381
      %p392 = scmp.eq.s32.totalorder %s40, 0
      %p393 = por %p391, %p392
      %p394 = scmp.ne.s32.totalorder %s380, %s381
      %p395 = scmp.eq.s32.totalorder %s41, 1
      %p396 = por %p394, %p395
      %p398 = scmp.ne.s32.totalorder %s381, %s397
      %p399 = scmp.eq.s32.totalorder %s41, 0
      %p400 = por %p398, %p399
      %p401 = scmp.le.s32.totalorder 1, %s35
      %p402 = scmp.lt.s32.totalorder %s35, 3
      %p403 = pnand %p401, %p402
      %p404 = pneg %p403
      // Predicated region
      $region9: #{tpu_custom_call.1} parent=5 // pred_check
        _
      $region10: #{tpu_custom_call.1} parent=5 // pred_check_branch
        %406 = sbr.rel (%p403) target = $region12
      $region11: #{tpu_custom_call.1} parent=5 // pred_region
        %s407 = ssub.s32 %s35, 1
        // Predicated region
        $region13: #{tpu_custom_call.1} parent=11 // pred_check
          %p408 = pneg %p148
        $region14: #{tpu_custom_call.1} parent=11 // pred_check_branch
          %410 = sbr.rel (%p408) target = $region16
        $region15: #{tpu_custom_call.1} parent=11 // pred_region
          %s412 = ssub.s32 512, 512
          %413 = vsyncadd [#allocation13], %s412
          %s414 = sshll.u32 [#allocation12], 4
          %s415 = int_to_ptr.vmem [resolvable:$true] %s414
          %420 = dma.hbm_to_vmem [thread:$0]  %s3, 512, %s415, [#allocation13], 128, 128, 8
        $region16: #{tpu_custom_call.1} parent=11 // pred_fallthru
          _
        // Predicated region
        $region17: #{tpu_custom_call.1} parent=11 // pred_check
          %p421 = pneg %p169
        $region18: #{tpu_custom_call.1} parent=11 // pred_check_branch
          %423 = sbr.rel (%p421) target = $region20
        $region19: #{tpu_custom_call.1} parent=11 // pred_region
          _
        $region20: #{tpu_custom_call.1} parent=11 // pred_fallthru
          _
        // Predicated region
        $region21: #{tpu_custom_call.1} parent=11 // pred_check
          %p424 = pneg %p190
        $region22: #{tpu_custom_call.1} parent=11 // pred_check_branch
          %426 = sbr.rel (%p424) target = $region24
        $region23: #{tpu_custom_call.1} parent=11 // pred_region
          %s428 = ssub.s32 512, 512
          %429 = vsyncadd [#allocation13], %s428
          %s430 = sshll.u32 [#allocation14], 4
          %s431 = int_to_ptr.vmem [resolvable:$true] %s430
          %436 = dma.hbm_to_vmem [thread:$0]  %s5, 512, %s431, [#allocation13], 128, 128, 8
        $region24: #{tpu_custom_call.1} parent=11 // pred_fallthru
          _
        // Predicated region
        $region25: #{tpu_custom_call.1} parent=11 // pred_check
          %p437 = pneg %p211
        $region26: #{tpu_custom_call.1} parent=11 // pred_check_branch
          %439 = sbr.rel (%p437) target = $region28
        $region27: #{tpu_custom_call.1} parent=11 // pred_region
          _
        $region28: #{tpu_custom_call.1} parent=11 // pred_fallthru
          _
        // Predicated region
        $region29: #{tpu_custom_call.1} parent=11 // pred_check
          %p440 = pneg %p232
        $region30: #{tpu_custom_call.1} parent=11 // pred_check_branch
          %442 = sbr.rel (%p440) target = $region32
        $region31: #{tpu_custom_call.1} parent=11 // pred_region
          %s444 = ssub.s32 512, 512
          %445 = vsyncadd [#allocation16], %s444
          %s446 = sshll.u32 [#allocation15], 4
          %s447 = int_to_ptr.vmem [resolvable:$true] %s446
          %452 = dma.hbm_to_vmem [thread:$0]  %s7, 512, %s447, [#allocation16], 128, 128, 8
        $region32: #{tpu_custom_call.1} parent=11 // pred_fallthru
          _
        // Predicated region
        $region33: #{tpu_custom_call.1} parent=11 // pred_check
          %p453 = pneg %p253
        $region34: #{tpu_custom_call.1} parent=11 // pred_check_branch
          %455 = sbr.rel (%p453) target = $region36
        $region35: #{tpu_custom_call.1} parent=11 // pred_region
          %s457 = ssub.s32 16, 16
          %458 = vsyncadd [#allocation16], %s457
          %s460 = sshll.u32 [#allocation17], 4
          %s461 = int_to_ptr.vmem [resolvable:$true] %s460
          %463 = dma.hbm_to_vmem [thread:$0]  %s8, 16, %s461, [#allocation16]
        $region36: #{tpu_custom_call.1} parent=11 // pred_fallthru
          _
        // Predicated region
        $region37: #{tpu_custom_call.1} parent=11 // pred_check
          %p464 = pneg %p274
        $region38: #{tpu_custom_call.1} parent=11 // pred_check_branch
          %466 = sbr.rel (%p464) target = $region40
        $region39: #{tpu_custom_call.1} parent=11 // pred_region
          _
        $region40: #{tpu_custom_call.1} parent=11 // pred_fallthru
          _
        // Predicated region
        $region41: #{tpu_custom_call.1} parent=11 // pred_check
          %p467 = pneg %p295
        $region42: #{tpu_custom_call.1} parent=11 // pred_check_branch
          %469 = sbr.rel (%p467) target = $region44
        $region43: #{tpu_custom_call.1} parent=11 // pred_region
          _
        $region44: #{tpu_custom_call.1} parent=11 // pred_fallthru
          _
        // Predicated region
        $region45: #{tpu_custom_call.1} parent=11 // pred_check
          %p470 = pneg %p316
        $region46: #{tpu_custom_call.1} parent=11 // pred_check_branch
          %472 = sbr.rel (%p470) target = $region48
        $region47: #{tpu_custom_call.1} parent=11 // pred_region
          _
        $region48: #{tpu_custom_call.1} parent=11 // pred_fallthru
          _
        // Predicated region
        $region49: #{tpu_custom_call.1} parent=11 // pred_check
          %p473 = pneg %p337
        $region50: #{tpu_custom_call.1} parent=11 // pred_check_branch
          %475 = sbr.rel (%p473) target = $region52
        $region51: #{tpu_custom_call.1} parent=11 // pred_region
          _
        $region52: #{tpu_custom_call.1} parent=11 // pred_fallthru
          _
      $region12: #{tpu_custom_call.1} parent=5 // pred_fallthru
        _
      %p476 = scmp.lt.s32.totalorder %s35, 2
      // Predicated region
      $region53: #{tpu_custom_call.1} parent=5 // pred_check
        %p477 = pneg %p476
      $region54: #{tpu_custom_call.1} parent=5 // pred_check_branch
        %479 = sbr.rel (%p477) target = $region56
      $region55: #{tpu_custom_call.1} parent=5 // pred_region
        // Predicated region
        $region57: #{tpu_custom_call.1} parent=55 // pred_check
          %p480 = pneg %p69
        $region58: #{tpu_custom_call.1} parent=55 // pred_check_branch
          %482 = sbr.rel (%p480) target = $region60
        $region59: #{tpu_custom_call.1} parent=55 // pred_region
          %s483 = sand.u32 %s59, 1
          %s484 = scalar_lea.sflag [#allocation7], %s483
          %s485 = sand.u32 %s59, 1
          %s486 = smul.addr %s485, 8
          %s487 = scalar_lea.vmem [#allocation6], %s486
          %s489 = ssub.s32 128, 128
          %490 = vsyncadd %s484, %s489
          %s491 = sadd.s32 %s43, %s42
          %s492 = smul.addr %s491, 128
          %s493 = scalar_lea.hbm %s0, %s492
          %s495 = sshll.u32 %s487, 4
          %s496 = int_to_ptr.vmem [resolvable:$true] %s495
          %498 = dma.hbm_to_vmem [thread:$0]  %s493, 128, %s496, %s484
        $region60: #{tpu_custom_call.1} parent=55 // pred_fallthru
          _
        // Predicated region
        $region61: #{tpu_custom_call.1} parent=55 // pred_check
          %p499 = pneg %p95
        $region62: #{tpu_custom_call.1} parent=55 // pred_check_branch
          %501 = sbr.rel (%p499) target = $region64
        $region63: #{tpu_custom_call.1} parent=55 // pred_region
          %s502 = sand.u32 %s35, 1
          %s503 = scalar_lea.sflag [#allocation10], %s502
          %s504 = sand.u32 %s85, 1
          %s505 = smul.addr %s504, 8
          %s506 = scalar_lea.vmem [#allocation9], %s505
          %s508 = ssub.s32 128, 128
          %509 = vsyncadd %s503, %s508
          %s510 = smul.addr %s42, 128
          %s511 = scalar_lea.hbm %s1, %s510
          %s513 = sshll.u32 %s506, 4
          %s514 = int_to_ptr.vmem [resolvable:$true] %s513
          %516 = dma.hbm_to_vmem [thread:$0]  %s511, 128, %s514, %s503
        $region64: #{tpu_custom_call.1} parent=55 // pred_fallthru
          _
        // Predicated region
        $region65: #{tpu_custom_call.1} parent=55 // pred_check
          %p517 = pneg %p121
        $region66: #{tpu_custom_call.1} parent=55 // pred_check_branch
          %519 = sbr.rel (%p517) target = $region68
        $region67: #{tpu_custom_call.1} parent=55 // pred_region
          %s520 = sand.u32 %s35, 1
          %s521 = scalar_lea.sflag [#allocation10], %s520
          %s522 = sand.u32 %s111, 1
          %s523 = smul.addr %s522, 8
          %s524 = scalar_lea.vmem [#allocation11], %s523
          %s526 = ssub.s32 128, 128
          %527 = vsyncadd %s521, %s526
          %s528 = smul.addr %s42, 128
          %s529 = scalar_lea.hbm %s2, %s528
          %s531 = sshll.u32 %s524, 4
          %s532 = int_to_ptr.vmem [resolvable:$true] %s531
          %534 = dma.hbm_to_vmem [thread:$0]  %s529, 128, %s532, %s521
        $region68: #{tpu_custom_call.1} parent=55 // pred_fallthru
          _
      $region56: #{tpu_custom_call.1} parent=5 // pred_fallthru
        _
      %p535 = scmp.le.s32.totalorder 1, %s35
      %p536 = scmp.lt.s32.totalorder %s35, 3
      %p537 = pnand %p535, %p536
      %p538 = pneg %p537
      // Predicated region
      $region69: #{tpu_custom_call.1} parent=5 // pred_check
        _
      $region70: #{tpu_custom_call.1} parent=5 // pred_check_branch
        %540 = sbr.rel (%p537) target = $region72
      $region71: #{tpu_custom_call.1} parent=5 // pred_region
        %s541 = ssub.s32 %s35, 1
        %s542 = sand.u32 %s62, 1
        %s543 = scalar_lea.sflag [#allocation7], %s542
        %s544 = sand.u32 %s62, 1
        %s545 = smul.addr %s544, 8
        %s546 = scalar_lea.vmem [#allocation6], %s545
        // Predicated region
        $region73: #{tpu_custom_call.1} parent=71 // pred_check
          %p547 = pneg %p75
        $region74: #{tpu_custom_call.1} parent=71 // pred_check_branch
          %549 = sbr.rel (%p547) target = $region76
        $region75: #{tpu_custom_call.1} parent=71 // pred_region
          %550 = dma.done %s543, 128
        $region76: #{tpu_custom_call.1} parent=71 // pred_fallthru
          _
        %s551 = sand.u32 %s40, 1
        %s552 = scalar_lea.sflag [#allocation10], %s551
        %s553 = sand.u32 %s88, 1
        %s554 = smul.addr %s553, 8
        %s555 = scalar_lea.vmem [#allocation9], %s554
        // Predicated region
        $region77: #{tpu_custom_call.1} parent=71 // pred_check
          %p556 = pneg %p101
        $region78: #{tpu_custom_call.1} parent=71 // pred_check_branch
          %558 = sbr.rel (%p556) target = $region80
        $region79: #{tpu_custom_call.1} parent=71 // pred_region
          %559 = dma.done %s552, 128
        $region80: #{tpu_custom_call.1} parent=71 // pred_fallthru
          _
        %s560 = sand.u32 %s40, 1
        %s561 = scalar_lea.sflag [#allocation10], %s560
        %s562 = sand.u32 %s114, 1
        %s563 = smul.addr %s562, 8
        %s564 = scalar_lea.vmem [#allocation11], %s563
        // Predicated region
        $region81: #{tpu_custom_call.1} parent=71 // pred_check
          %p565 = pneg %p127
        $region82: #{tpu_custom_call.1} parent=71 // pred_check_branch
          %567 = sbr.rel (%p565) target = $region84
        $region83: #{tpu_custom_call.1} parent=71 // pred_region
          %568 = dma.done %s561, 128
        $region84: #{tpu_custom_call.1} parent=71 // pred_fallthru
          _
        // Predicated region
        $region85: #{tpu_custom_call.1} parent=71 // pred_check
          %p569 = pneg %p148
        $region86: #{tpu_custom_call.1} parent=71 // pred_check_branch
          %571 = sbr.rel (%p569) target = $region88
        $region87: #{tpu_custom_call.1} parent=71 // pred_region
          %572 = dma.done [#allocation13], 512
        $region88: #{tpu_custom_call.1} parent=71 // pred_fallthru
          _
        // Predicated region
        $region89: #{tpu_custom_call.1} parent=71 // pred_check
          %p573 = pneg %p190
        $region90: #{tpu_custom_call.1} parent=71 // pred_check_branch
          %575 = sbr.rel (%p573) target = $region92
        $region91: #{tpu_custom_call.1} parent=71 // pred_region
          %576 = dma.done [#allocation13], 512
        $region92: #{tpu_custom_call.1} parent=71 // pred_fallthru
          _
        // Predicated region
        $region93: #{tpu_custom_call.1} parent=71 // pred_check
          %p577 = pneg %p232
        $region94: #{tpu_custom_call.1} parent=71 // pred_check_branch
          %579 = sbr.rel (%p577) target = $region96
        $region95: #{tpu_custom_call.1} parent=71 // pred_region
          %580 = dma.done [#allocation16], 512
        $region96: #{tpu_custom_call.1} parent=71 // pred_fallthru
          _
        // Predicated region
        $region97: #{tpu_custom_call.1} parent=71 // pred_check
          %p581 = pneg %p253
        $region98: #{tpu_custom_call.1} parent=71 // pred_check_branch
          %583 = sbr.rel (%p581) target = $region100
        $region99: #{tpu_custom_call.1} parent=71 // pred_region
          %584 = dma.done [#allocation16], 16
        $region100: #{tpu_custom_call.1} parent=71 // pred_fallthru
          _
        %s585 = sand.u32 %s62, 1
        %s586 = scalar_lea.sflag [#allocation7], %s585
        %s587 = sand.u32 %s62, 1
        %s588 = smul.addr %s587, 8
        %s589 = scalar_lea.vmem [#allocation6], %s588
        %p590 = pneg %p75
        %p591 = pneg %p72
        %s592 = sand.u32 %s40, 1
        %s593 = scalar_lea.sflag [#allocation10], %s592
        %s594 = sand.u32 %s88, 1
        %s595 = smul.addr %s594, 8
        %s596 = scalar_lea.vmem [#allocation9], %s595
        %p597 = pneg %p101
        %p598 = pneg %p98
        %s599 = sand.u32 %s40, 1
        %s600 = scalar_lea.sflag [#allocation10], %s599
        %s601 = sand.u32 %s114, 1
        %s602 = smul.addr %s601, 8
        %s603 = scalar_lea.vmem [#allocation11], %s602
        %p604 = pneg %p127
        %p605 = pneg %p124
        %p606 = pneg %p148
        %p607 = pneg %p145
        %p608 = pneg %p169
        %p609 = pneg %p166
        %p610 = pneg %p190
        %p611 = pneg %p187
        %p612 = pneg %p211
        %p613 = pneg %p208
        %p614 = pneg %p232
        %p615 = pneg %p229
        %p616 = pneg %p253
        %p617 = pneg %p250
        %p618 = pneg %p274
        %p619 = pneg %p271
        %p620 = pneg %p295
        %p621 = pneg %p292
        %p622 = pneg %p316
        %p623 = pneg %p313
        %p624 = pneg %p337
        %p625 = pneg %p334
        %p626 = pneg %p365
        %p627 = pneg %p362
        %s628 = sand.u32 %s352, 1
        %s629 = scalar_lea.sflag [#allocation8], %s628
        %s630 = sand.u32 %s352, 1
        %s631 = smul.addr %s630, 8
        %s632 = scalar_lea.vmem [#allocation18], %s631
        %p633 = pneg %p393
        %p634 = pneg %p390
        %s635 = sand.u32 %s380, 1
        %s636 = scalar_lea.sflag [#allocation20], %s635
        %s637 = sand.u32 %s380, 1
        %s638 = smul.addr %s637, 32
        %s639 = scalar_lea.vmem [#allocation19], %s638
        %p640 = scmp.eq.s32.totalorder %s45, 0
        // Predicated region
        $region101: #{tpu_custom_call.1} parent=71 // pred_check
          %p641 = pneg %p640
        $region102: #{tpu_custom_call.1} parent=71 // pred_check_branch
          %643 = sbr.rel (%p641) target = $region104
        $region103: #{tpu_custom_call.1} parent=71 // pred_region
          %v644 = vld [vmem:[%s555] sm:$0xff]
          %v645 = vld [vmem:[%s564] sm:$0xff]
          %v646 = vld [vmem:[#allocation14] sm:$0xff]
          %v647 = vld [vmem:[#allocation14 + $0x8] sm:$0xff]
          %v648 = vld [vmem:[#allocation14 + $0x10] sm:$0xff]
          %v649 = vld [vmem:[#allocation14 + $0x18] sm:$0xff]
          %v650 = vld [vmem:[%s6] sm:$0x1]
          %v652 = vlaneseq
          %v653 = vshrl.u32 %v652, 7
          %v654 = vsub.s32 0, %v653
          %v655 = vrot.slane %v650, %v654
          %vm657 = vcmask 261120
          %v659 = vsel %vm657, %v644, 0
          %661 = vmatprep.subr.mxu0 0.0
          %662 = vmatpush1.msra.mxu0 %v646
          %663 = vmatprep.subr.mxu0 0.0
          %664 = vmatpush1.msra.mxu0 %v647
          %665 = vmatprep.subr.mxu0 0.0
          %666 = vmatpush1.msra.mxu0 %v648
          %667 = vmatprep.subr.mxu0 0.0
          %668 = vmatpush1.msra.mxu0 %v649
          %669 = vmatprep.subr.mxu0 0.0
          %670 = vmatpush1.msra.mxu0 0.0
          %671 = vmatprep.subr.mxu0 0.0
          %672 = vmatpush1.msra.mxu0 0.0
          %673 = vmatprep.subr.mxu0 0.0
          %674 = vmatpush1.msra.mxu0 0.0
          %675 = vmatprep.subr.mxu0 0.0
          %676 = vmatpush1.msra.mxu0 0.0
          %677 = vmatprep.subr.mxu0 0.0
          %678 = vmatpush1.msra.mxu0 0.0
          %679 = vmatprep.subr.mxu0 0.0
          %680 = vmatpush1.msra.mxu0 0.0
          %681 = vmatprep.subr.mxu0 0.0
          %682 = vmatpush1.msra.mxu0 0.0
          %683 = vmatprep.subr.mxu0 0.0
          %684 = vmatpush1.msra.mxu0 0.0
          %685 = vmatprep.subr.mxu0 0.0
          %686 = vmatpush1.msra.mxu0 0.0
          %687 = vmatprep.subr.mxu0 0.0
          %688 = vmatpush1.msra.mxu0 0.0
          %689 = vmatprep.subr.mxu0 0.0
          %690 = vmatpush1.msra.mxu0 0.0
          %691 = vmatprep.subr.mxu0 0.0
          %692 = vmatpush1.msra.mxu0 0.0
          %693 = vmatprep.subr.mxu0 0.0
          %694 = vmatpush1.msra.mxu0 0.0
          %695 = vmatprep.subr.mxu0 0.0
          %696 = vmatpush1.msra.mxu0 0.0
          %697 = vmatprep.subr.mxu0 0.0
          %698 = vmatpush1.msra.mxu0 0.0
          %699 = vmatprep.subr.mxu0 0.0
          %700 = vmatpush1.msra.mxu0 0.0
          %701 = vmatprep.subr.mxu0 0.0
          %702 = vmatpush1.msra.mxu0 0.0
          %703 = vmatprep.subr.mxu0 0.0
          %704 = vmatpush1.msra.mxu0 0.0
          %705 = vmatprep.subr.mxu0 0.0
          %706 = vmatpush1.msra.mxu0 0.0
          %707 = vmatprep.subr.mxu0 0.0
          %708 = vmatpush1.msra.mxu0 0.0
          %709 = vmatprep.subr.mxu0 0.0
          %710 = vmatpush1.msra.mxu0 0.0
          %711 = vmatprep.subr.mxu0 0.0
          %712 = vmatpush1.msra.mxu0 0.0
          %713 = vmatprep.subr.mxu0 0.0
          %714 = vmatpush1.msra.mxu0 0.0
          %715 = vmatprep.subr.mxu0 0.0
          %716 = vmatpush1.msra.mxu0 0.0
          %717 = vmatprep.subr.mxu0 0.0
          %718 = vmatpush1.msra.mxu0 0.0
          %719 = vmatprep.subr.mxu0 0.0
          %720 = vmatpush1.msra.mxu0 0.0
          %721 = vmatprep.subr.mxu0 0.0
          %722 = vmatpush1.msra.mxu0 0.0
          %723 = vmatprep.subr.mxu0 0.0
          %724 = vmatpush1.msra.mxu0 0.0
          %725 = vmatprep.mubr.f32.mxu0 0.0
          %726 = vmatmul.mubr.f32.gmra.mrb[0].mxu0 %v659
          %v727 = vpop.f32.mrb[0].mxu0
          %v728 = vadd.f32 %v655, %v727
          %v729 = vpop.f32.mrb[0].mxu0
          %730 = vdwg.mxu0
          %v731 = vld [vmem:[#allocation15] sm:$0xff]
          %v732 = vld [vmem:[#allocation15 + $0x8] sm:$0xff]
          %v733 = vld [vmem:[#allocation15 + $0x10] sm:$0xff]
          %v734 = vld [vmem:[#allocation15 + $0x18] sm:$0xff]
          %v735 = vld [vmem:[#allocation17] sm:$0x1]
          %v737 = vlaneseq
          %v738 = vshrl.u32 %v737, 7
          %v739 = vsub.s32 0, %v738
          %v740 = vrot.slane %v735, %v739
          %v743 = vsel %vm657, %v645, 0
          %745 = vmatprep.subr.mxu0 0.0
          %746 = vmatpush1.msra.mxu0 %v731
          %747 = vmatprep.subr.mxu0 0.0
          %748 = vmatpush1.msra.mxu0 %v732
          %749 = vmatprep.subr.mxu0 0.0
          %750 = vmatpush1.msra.mxu0 %v733
          %751 = vmatprep.subr.mxu0 0.0
          %752 = vmatpush1.msra.mxu0 %v734
          %753 = vmatprep.subr.mxu0 0.0
          %754 = vmatpush1.msra.mxu0 0.0
          %755 = vmatprep.subr.mxu0 0.0
          %756 = vmatpush1.msra.mxu0 0.0
          %757 = vmatprep.subr.mxu0 0.0
          %758 = vmatpush1.msra.mxu0 0.0
          %759 = vmatprep.subr.mxu0 0.0
          %760 = vmatpush1.msra.mxu0 0.0
          %761 = vmatprep.subr.mxu0 0.0
          %762 = vmatpush1.msra.mxu0 0.0
          %763 = vmatprep.subr.mxu0 0.0
          %764 = vmatpush1.msra.mxu0 0.0
          %765 = vmatprep.subr.mxu0 0.0
          %766 = vmatpush1.msra.mxu0 0.0
          %767 = vmatprep.subr.mxu0 0.0
          %768 = vmatpush1.msra.mxu0 0.0
          %769 = vmatprep.subr.mxu0 0.0
          %770 = vmatpush1.msra.mxu0 0.0
          %771 = vmatprep.subr.mxu0 0.0
          %772 = vmatpush1.msra.mxu0 0.0
          %773 = vmatprep.subr.mxu0 0.0
          %774 = vmatpush1.msra.mxu0 0.0
          %775 = vmatprep.subr.mxu0 0.0
          %776 = vmatpush1.msra.mxu0 0.0
          %777 = vmatprep.subr.mxu0 0.0
          %778 = vmatpush1.msra.mxu0 0.0
          %779 = vmatprep.subr.mxu0 0.0
          %780 = vmatpush1.msra.mxu0 0.0
          %781 = vmatprep.subr.mxu0 0.0
          %782 = vmatpush1.msra.mxu0 0.0
          %783 = vmatprep.subr.mxu0 0.0
          %784 = vmatpush1.msra.mxu0 0.0
          %785 = vmatprep.subr.mxu0 0.0
          %786 = vmatpush1.msra.mxu0 0.0
          %787 = vmatprep.subr.mxu0 0.0
          %788 = vmatpush1.msra.mxu0 0.0
          %789 = vmatprep.subr.mxu0 0.0
          %790 = vmatpush1.msra.mxu0 0.0
          %791 = vmatprep.subr.mxu0 0.0
          %792 = vmatpush1.msra.mxu0 0.0
          %793 = vmatprep.subr.mxu0 0.0
          %794 = vmatpush1.msra.mxu0 0.0
          %795 = vmatprep.subr.mxu0 0.0
          %796 = vmatpush1.msra.mxu0 0.0
          %797 = vmatprep.subr.mxu0 0.0
          %798 = vmatpush1.msra.mxu0 0.0
          %799 = vmatprep.subr.mxu0 0.0
          %800 = vmatpush1.msra.mxu0 0.0
          %801 = vmatprep.subr.mxu0 0.0
          %802 = vmatpush1.msra.mxu0 0.0
          %803 = vmatprep.subr.mxu0 0.0
          %804 = vmatpush1.msra.mxu0 0.0
          %805 = vmatprep.subr.mxu0 0.0
          %806 = vmatpush1.msra.mxu0 0.0
          %807 = vmatprep.subr.mxu0 0.0
          %808 = vmatpush1.msra.mxu0 0.0
          %809 = vmatprep.mubr.f32.mxu0 0.0
          %810 = vmatmul.mubr.f32.gmra.mrb[0].mxu0 %v743
          %v811 = vpop.f32.mrb[0].mxu0
          %v812 = vadd.f32 %v740, %v811
          %v813 = vpop.f32.mrb[0].mxu0
          %814 = vdwg.mxu0
          %vm815 = vcmask 64512
          %816 = vst.msk [vmem:[#allocation3] sm:$0xff] %vm815, %v728
          %817 = vst.msk [vmem:[#allocation4] sm:$0xff] %vm815, %v812
          %819 = vrot.lane.b32.xlu0 %v728, 120
          %v820 = vpop.permute.xlu0 %819
          %s822 = scalar_lea.vmem [#allocation3], 8
          %823 = vst.msk [vmem:[%s822] sm:$0xff] %vm815, %v820
          %825 = vrot.lane.b32.xlu0 %v812, 120
          %v826 = vpop.permute.xlu0 %825
          %s828 = scalar_lea.vmem [#allocation4], 8
          %829 = vst.msk [vmem:[%s828] sm:$0xff] %vm815, %v826
          %830 = vrot.lane.b32.xlu0 %v728, 112
          %v831 = vpop.permute.xlu0 %830
          %s833 = scalar_lea.vmem [#allocation3], 16
          %834 = vst.msk [vmem:[%s833] sm:$0xff] %vm815, %v831
          %835 = vrot.lane.b32.xlu0 %v812, 112
          %v836 = vpop.permute.xlu0 %835
          %s838 = scalar_lea.vmem [#allocation4], 16
          %839 = vst.msk [vmem:[%s838] sm:$0xff] %vm815, %v836
          %840 = vrot.lane.b32.xlu0 %v728, 104
          %v841 = vpop.permute.xlu0 %840
          %s843 = scalar_lea.vmem [#allocation3], 24
          %844 = vst.msk [vmem:[%s843] sm:$0xff] %vm815, %v841
          %845 = vrot.lane.b32.xlu0 %v812, 104
          %v846 = vpop.permute.xlu0 %845
          %s848 = scalar_lea.vmem [#allocation4], 24
          %849 = vst.msk [vmem:[%s848] sm:$0xff] %vm815, %v846
        $region104: #{tpu_custom_call.1} parent=71 // pred_fallthru
          _
        %v850 = vld [vmem:[%s546] sm:$0xff]
        %v851 = vld [vmem:[#allocation12] sm:$0xff]
        %v852 = vld [vmem:[#allocation12 + $0x8] sm:$0xff]
        %v853 = vld [vmem:[#allocation12 + $0x10] sm:$0xff]
        %v854 = vld [vmem:[#allocation12 + $0x18] sm:$0xff]
        %v855 = vld [vmem:[%s4] sm:$0x1]
        %v857 = vlaneseq
        %v858 = vshrl.u32 %v857, 7
        %v859 = vsub.s32 0, %v858
        %v860 = vrot.slane %v855, %v859
        %vm862 = vcmask 261120
        %v864 = vsel %vm862, %v850, 0
        %866 = vmatprep.subr.mxu0 0.0
        %867 = vmatpush1.msra.mxu0 %v851
        %868 = vmatprep.subr.mxu0 0.0
        %869 = vmatpush1.msra.mxu0 %v852
        %870 = vmatprep.subr.mxu0 0.0
        %871 = vmatpush1.msra.mxu0 %v853
        %872 = vmatprep.subr.mxu0 0.0
        %873 = vmatpush1.msra.mxu0 %v854
        %874 = vmatprep.subr.mxu0 0.0
        %875 = vmatpush1.msra.mxu0 0.0
        %876 = vmatprep.subr.mxu0 0.0
        %877 = vmatpush1.msra.mxu0 0.0
        %878 = vmatprep.subr.mxu0 0.0
        %879 = vmatpush1.msra.mxu0 0.0
        %880 = vmatprep.subr.mxu0 0.0
        %881 = vmatpush1.msra.mxu0 0.0
        %882 = vmatprep.subr.mxu0 0.0
        %883 = vmatpush1.msra.mxu0 0.0
        %884 = vmatprep.subr.mxu0 0.0
        %885 = vmatpush1.msra.mxu0 0.0
        %886 = vmatprep.subr.mxu0 0.0
        %887 = vmatpush1.msra.mxu0 0.0
        %888 = vmatprep.subr.mxu0 0.0
        %889 = vmatpush1.msra.mxu0 0.0
        %890 = vmatprep.subr.mxu0 0.0
        %891 = vmatpush1.msra.mxu0 0.0
        %892 = vmatprep.subr.mxu0 0.0
        %893 = vmatpush1.msra.mxu0 0.0
        %894 = vmatprep.subr.mxu0 0.0
        %895 = vmatpush1.msra.mxu0 0.0
        %896 = vmatprep.subr.mxu0 0.0
        %897 = vmatpush1.msra.mxu0 0.0
        %898 = vmatprep.subr.mxu0 0.0
        %899 = vmatpush1.msra.mxu0 0.0
        %900 = vmatprep.subr.mxu0 0.0
        %901 = vmatpush1.msra.mxu0 0.0
        %902 = vmatprep.subr.mxu0 0.0
        %903 = vmatpush1.msra.mxu0 0.0
        %904 = vmatprep.subr.mxu0 0.0
        %905 = vmatpush1.msra.mxu0 0.0
        %906 = vmatprep.subr.mxu0 0.0
        %907 = vmatpush1.msra.mxu0 0.0
        %908 = vmatprep.subr.mxu0 0.0
        %909 = vmatpush1.msra.mxu0 0.0
        %910 = vmatprep.subr.mxu0 0.0
        %911 = vmatpush1.msra.mxu0 0.0
        %912 = vmatprep.subr.mxu0 0.0
        %913 = vmatpush1.msra.mxu0 0.0
        %914 = vmatprep.subr.mxu0 0.0
        %915 = vmatpush1.msra.mxu0 0.0
        %916 = vmatprep.subr.mxu0 0.0
        %917 = vmatpush1.msra.mxu0 0.0
        %918 = vmatprep.subr.mxu0 0.0
        %919 = vmatpush1.msra.mxu0 0.0
        %920 = vmatprep.subr.mxu0 0.0
        %921 = vmatpush1.msra.mxu0 0.0
        %922 = vmatprep.subr.mxu0 0.0
        %923 = vmatpush1.msra.mxu0 0.0
        %924 = vmatprep.subr.mxu0 0.0
        %925 = vmatpush1.msra.mxu0 0.0
        %926 = vmatprep.subr.mxu0 0.0
        %927 = vmatpush1.msra.mxu0 0.0
        %928 = vmatprep.subr.mxu0 0.0
        %929 = vmatpush1.msra.mxu0 0.0
        %930 = vmatprep.mubr.f32.mxu0 0.0
        %931 = vmatmul.mubr.f32.gmra.mrb[0].mxu0 %v864
        %v932 = vpop.f32.mrb[0].mxu0
        %v933 = vadd.f32 %v860, %v932
        %v934 = vpop.f32.mrb[0].mxu0
        %935 = vdwg.mxu0
        %v936 = vmul.f32 %v933, 0.35355338
        %vm937 = vcmask 64512
        %938 = vst.msk [vmem:[#allocation2] sm:$0xff] %vm937, %v936
        %940 = vrot.lane.b32.xlu0 %v936, 120
        %v941 = vpop.permute.xlu0 %940
        %s943 = scalar_lea.vmem [#allocation2], 8
        %944 = vst.msk [vmem:[%s943] sm:$0xff] %vm937, %v941
        %945 = vrot.lane.b32.xlu0 %v936, 112
        %v946 = vpop.permute.xlu0 %945
        %s948 = scalar_lea.vmem [#allocation2], 16
        %949 = vst.msk [vmem:[%s948] sm:$0xff] %vm937, %v946
        %950 = vrot.lane.b32.xlu0 %v936, 104
        %v951 = vpop.permute.xlu0 %950
        %s953 = scalar_lea.vmem [#allocation2], 24
        %954 = vst.msk [vmem:[%s953] sm:$0xff] %vm937, %v951
        %v955 = vld [vmem:[#allocation2] sm:$0xff]
        %v956 = vld [vmem:[#allocation2 + $0x8] sm:$0xff]
        %v957 = vld [vmem:[#allocation2 + $0x10] sm:$0xff]
        %v958 = vld [vmem:[#allocation2 + $0x18] sm:$0xff]
        %v959 = vld [vmem:[#allocation3] sm:$0xff]
        %v960 = vld [vmem:[#allocation3 + $0x8] sm:$0xff]
        %v961 = vld [vmem:[#allocation3 + $0x10] sm:$0xff]
        %v962 = vld [vmem:[#allocation3 + $0x18] sm:$0xff]
        %v963 = vld [vmem:[#allocation4] sm:$0xff]
        %v964 = vld [vmem:[#allocation4 + $0x8] sm:$0xff]
        %v965 = vld [vmem:[#allocation4 + $0x10] sm:$0xff]
        %v966 = vld [vmem:[#allocation4 + $0x18] sm:$0xff]
        %v968 = vsel %vm937, %v955, 0
        %v971 = vsel %vm937, %v959, 0
        %973 = vmatprep.subr.mxu0 0.0
        %974 = vmatpush1.xpose.msra.mxu0 %v971
        %975 = vmatprep.subr.mxu0 0.0
        %976 = vmatpush1.xpose.msra.mxu0 0.0
        %977 = vmatprep.subr.mxu0 0.0
        %978 = vmatpush1.xpose.msra.mxu0 0.0
        %979 = vmatprep.subr.mxu0 0.0
        %980 = vmatpush1.xpose.msra.mxu0 0.0
        %981 = vmatprep.subr.mxu0 0.0
        %982 = vmatpush1.xpose.msra.mxu0 0.0
        %983 = vmatprep.subr.mxu0 0.0
        %984 = vmatpush1.xpose.msra.mxu0 0.0
        %985 = vmatprep.subr.mxu0 0.0
        %986 = vmatpush1.xpose.msra.mxu0 0.0
        %987 = vmatprep.subr.mxu0 0.0
        %988 = vmatpush1.xpose.msra.mxu0 0.0
        %989 = vmatprep.subr.mxu0 0.0
        %990 = vmatpush1.xpose.msra.mxu0 0.0
        %991 = vmatprep.subr.mxu0 0.0
        %992 = vmatpush1.xpose.msra.mxu0 0.0
        %993 = vmatprep.subr.mxu0 0.0
        %994 = vmatpush1.xpose.msra.mxu0 0.0
        %995 = vmatprep.subr.mxu0 0.0
        %996 = vmatpush1.xpose.msra.mxu0 0.0
        %997 = vmatprep.subr.mxu0 0.0
        %998 = vmatpush1.xpose.msra.mxu0 0.0
        %999 = vmatprep.subr.mxu0 0.0
        %1000 = vmatpush1.xpose.msra.mxu0 0.0
        %1001 = vmatprep.subr.mxu0 0.0
        %1002 = vmatpush1.xpose.msra.mxu0 0.0
        %1003 = vmatprep.subr.mxu0 0.0
        %1004 = vmatpush1.xpose.msra.mxu0 0.0
        %1005 = vmatprep.subr.mxu0 0.0
        %1006 = vmatpush1.xpose.msra.mxu0 0.0
        %1007 = vmatprep.subr.mxu0 0.0
        %1008 = vmatpush1.xpose.msra.mxu0 0.0
        %1009 = vmatprep.subr.mxu0 0.0
        %1010 = vmatpush1.xpose.msra.mxu0 0.0
        %1011 = vmatprep.subr.mxu0 0.0
        %1012 = vmatpush1.xpose.msra.mxu0 0.0
        %1013 = vmatprep.subr.mxu0 0.0
        %1014 = vmatpush1.xpose.msra.mxu0 0.0
        %1015 = vmatprep.subr.mxu0 0.0
        %1016 = vmatpush1.xpose.msra.mxu0 0.0
        %1017 = vmatprep.subr.mxu0 0.0
        %1018 = vmatpush1.xpose.msra.mxu0 0.0
        %1019 = vmatprep.subr.mxu0 0.0
        %1020 = vmatpush1.xpose.msra.mxu0 0.0
        %1021 = vmatprep.subr.mxu0 0.0
        %1022 = vmatpush1.xpose.msra.mxu0 0.0
        %1023 = vmatprep.subr.mxu0 0.0
        %1024 = vmatpush1.xpose.msra.mxu0 0.0
        %1025 = vmatprep.subr.mxu0 0.0
        %1026 = vmatpush1.xpose.msra.mxu0 0.0
        %1027 = vmatprep.subr.mxu0 0.0
        %1028 = vmatpush1.xpose.msra.mxu0 0.0
        %1029 = vmatprep.subr.mxu0 0.0
        %1030 = vmatpush1.xpose.msra.mxu0 0.0
        %1031 = vmatprep.subr.mxu0 0.0
        %1032 = vmatpush1.xpose.msra.mxu0 0.0
        %1033 = vmatprep.subr.mxu0 0.0
        %1034 = vmatpush1.xpose.msra.mxu0 0.0
        %1035 = vmatprep.subr.mxu0 0.0
        %1036 = vmatpush1.xpose.msra.mxu0 0.0
        %1037 = vmatprep.mubr.f32.mxu0 0.0
        %1038 = vmatmul.mubr.f32.gmra.mrb[0].mxu0 %v968
        %v1039 = vpop.f32.mrb[0].mxu0
        %v1040 = vadd.f32 0.0, %v1039
        %v1041 = vpop.f32.mrb[0].mxu0
        %1042 = vdwg.mxu0
        %v1044 = vsel %vm937, %v956, 0
        %v1047 = vsel %vm937, %v960, 0
        %1049 = vmatprep.subr.mxu0 0.0
        %1050 = vmatpush1.xpose.msra.mxu0 %v1047
        %1051 = vmatprep.subr.mxu0 0.0
        %1052 = vmatpush1.xpose.msra.mxu0 0.0
        %1053 = vmatprep.subr.mxu0 0.0
        %1054 = vmatpush1.xpose.msra.mxu0 0.0
        %1055 = vmatprep.subr.mxu0 0.0
        %1056 = vmatpush1.xpose.msra.mxu0 0.0
        %1057 = vmatprep.subr.mxu0 0.0
        %1058 = vmatpush1.xpose.msra.mxu0 0.0
        %1059 = vmatprep.subr.mxu0 0.0
        %1060 = vmatpush1.xpose.msra.mxu0 0.0
        %1061 = vmatprep.subr.mxu0 0.0
        %1062 = vmatpush1.xpose.msra.mxu0 0.0
        %1063 = vmatprep.subr.mxu0 0.0
        %1064 = vmatpush1.xpose.msra.mxu0 0.0
        %1065 = vmatprep.subr.mxu0 0.0
        %1066 = vmatpush1.xpose.msra.mxu0 0.0
        %1067 = vmatprep.subr.mxu0 0.0
        %1068 = vmatpush1.xpose.msra.mxu0 0.0
        %1069 = vmatprep.subr.mxu0 0.0
        %1070 = vmatpush1.xpose.msra.mxu0 0.0
        %1071 = vmatprep.subr.mxu0 0.0
        %1072 = vmatpush1.xpose.msra.mxu0 0.0
        %1073 = vmatprep.subr.mxu0 0.0
        %1074 = vmatpush1.xpose.msra.mxu0 0.0
        %1075 = vmatprep.subr.mxu0 0.0
        %1076 = vmatpush1.xpose.msra.mxu0 0.0
        %1077 = vmatprep.subr.mxu0 0.0
        %1078 = vmatpush1.xpose.msra.mxu0 0.0
        %1079 = vmatprep.subr.mxu0 0.0
        %1080 = vmatpush1.xpose.msra.mxu0 0.0
        %1081 = vmatprep.subr.mxu0 0.0
        %1082 = vmatpush1.xpose.msra.mxu0 0.0
        %1083 = vmatprep.subr.mxu0 0.0
        %1084 = vmatpush1.xpose.msra.mxu0 0.0
        %1085 = vmatprep.subr.mxu0 0.0
        %1086 = vmatpush1.xpose.msra.mxu0 0.0
        %1087 = vmatprep.subr.mxu0 0.0
        %1088 = vmatpush1.xpose.msra.mxu0 0.0
        %1089 = vmatprep.subr.mxu0 0.0
        %1090 = vmatpush1.xpose.msra.mxu0 0.0
        %1091 = vmatprep.subr.mxu0 0.0
        %1092 = vmatpush1.xpose.msra.mxu0 0.0
        %1093 = vmatprep.subr.mxu0 0.0
        %1094 = vmatpush1.xpose.msra.mxu0 0.0
        %1095 = vmatprep.subr.mxu0 0.0
        %1096 = vmatpush1.xpose.msra.mxu0 0.0
        %1097 = vmatprep.subr.mxu0 0.0
        %1098 = vmatpush1.xpose.msra.mxu0 0.0
        %1099 = vmatprep.subr.mxu0 0.0
        %1100 = vmatpush1.xpose.msra.mxu0 0.0
        %1101 = vmatprep.subr.mxu0 0.0
        %1102 = vmatpush1.xpose.msra.mxu0 0.0
        %1103 = vmatprep.subr.mxu0 0.0
        %1104 = vmatpush1.xpose.msra.mxu0 0.0
        %1105 = vmatprep.subr.mxu0 0.0
        %1106 = vmatpush1.xpose.msra.mxu0 0.0
        %1107 = vmatprep.subr.mxu0 0.0
        %1108 = vmatpush1.xpose.msra.mxu0 0.0
        %1109 = vmatprep.subr.mxu0 0.0
        %1110 = vmatpush1.xpose.msra.mxu0 0.0
        %1111 = vmatprep.subr.mxu0 0.0
        %1112 = vmatpush1.xpose.msra.mxu0 0.0
        %1113 = vmatprep.mubr.f32.mxu0 0.0
        %1114 = vmatmul.mubr.f32.gmra.mrb[0].mxu0 %v1044
        %v1115 = vpop.f32.mrb[0].mxu0
        %v1116 = vadd.f32 0.0, %v1115
        %v1117 = vpop.f32.mrb[0].mxu0
        %1118 = vdwg.mxu0
        %v1120 = vsel %vm937, %v957, 0
        %v1123 = vsel %vm937, %v961, 0
        %1125 = vmatprep.subr.mxu0 0.0
        %1126 = vmatpush1.xpose.msra.mxu0 %v1123
        %1127 = vmatprep.subr.mxu0 0.0
        %1128 = vmatpush1.xpose.msra.mxu0 0.0
        %1129 = vmatprep.subr.mxu0 0.0
        %1130 = vmatpush1.xpose.msra.mxu0 0.0
        %1131 = vmatprep.subr.mxu0 0.0
        %1132 = vmatpush1.xpose.msra.mxu0 0.0
        %1133 = vmatprep.subr.mxu0 0.0
        %1134 = vmatpush1.xpose.msra.mxu0 0.0
        %1135 = vmatprep.subr.mxu0 0.0
        %1136 = vmatpush1.xpose.msra.mxu0 0.0
        %1137 = vmatprep.subr.mxu0 0.0
        %1138 = vmatpush1.xpose.msra.mxu0 0.0
        %1139 = vmatprep.subr.mxu0 0.0
        %1140 = vmatpush1.xpose.msra.mxu0 0.0
        %1141 = vmatprep.subr.mxu0 0.0
        %1142 = vmatpush1.xpose.msra.mxu0 0.0
        %1143 = vmatprep.subr.mxu0 0.0
        %1144 = vmatpush1.xpose.msra.mxu0 0.0
        %1145 = vmatprep.subr.mxu0 0.0
        %1146 = vmatpush1.xpose.msra.mxu0 0.0
        %1147 = vmatprep.subr.mxu0 0.0
        %1148 = vmatpush1.xpose.msra.mxu0 0.0
        %1149 = vmatprep.subr.mxu0 0.0
        %1150 = vmatpush1.xpose.msra.mxu0 0.0
        %1151 = vmatprep.subr.mxu0 0.0
        %1152 = vmatpush1.xpose.msra.mxu0 0.0
        %1153 = vmatprep.subr.mxu0 0.0
        %1154 = vmatpush1.xpose.msra.mxu0 0.0
        %1155 = vmatprep.subr.mxu0 0.0
        %1156 = vmatpush1.xpose.msra.mxu0 0.0
        %1157 = vmatprep.subr.mxu0 0.0
        %1158 = vmatpush1.xpose.msra.mxu0 0.0
        %1159 = vmatprep.subr.mxu0 0.0
        %1160 = vmatpush1.xpose.msra.mxu0 0.0
        %1161 = vmatprep.subr.mxu0 0.0
        %1162 = vmatpush1.xpose.msra.mxu0 0.0
        %1163 = vmatprep.subr.mxu0 0.0
        %1164 = vmatpush1.xpose.msra.mxu0 0.0
        %1165 = vmatprep.subr.mxu0 0.0
        %1166 = vmatpush1.xpose.msra.mxu0 0.0
        %1167 = vmatprep.subr.mxu0 0.0
        %1168 = vmatpush1.xpose.msra.mxu0 0.0
        %1169 = vmatprep.subr.mxu0 0.0
        %1170 = vmatpush1.xpose.msra.mxu0 0.0
        %1171 = vmatprep.subr.mxu0 0.0
        %1172 = vmatpush1.xpose.msra.mxu0 0.0
        %1173 = vmatprep.subr.mxu0 0.0
        %1174 = vmatpush1.xpose.msra.mxu0 0.0
        %1175 = vmatprep.subr.mxu0 0.0
        %1176 = vmatpush1.xpose.msra.mxu0 0.0
        %1177 = vmatprep.subr.mxu0 0.0
        %1178 = vmatpush1.xpose.msra.mxu0 0.0
        %1179 = vmatprep.subr.mxu0 0.0
        %1180 = vmatpush1.xpose.msra.mxu0 0.0
        %1181 = vmatprep.subr.mxu0 0.0
        %1182 = vmatpush1.xpose.msra.mxu0 0.0
        %1183 = vmatprep.subr.mxu0 0.0
        %1184 = vmatpush1.xpose.msra.mxu0 0.0
        %1185 = vmatprep.subr.mxu0 0.0
        %1186 = vmatpush1.xpose.msra.mxu0 0.0
        %1187 = vmatprep.subr.mxu0 0.0
        %1188 = vmatpush1.xpose.msra.mxu0 0.0
        %1189 = vmatprep.mubr.f32.mxu0 0.0
        %1190 = vmatmul.mubr.f32.gmra.mrb[0].mxu0 %v1120
        %v1191 = vpop.f32.mrb[0].mxu0
        %v1192 = vadd.f32 0.0, %v1191
        %v1193 = vpop.f32.mrb[0].mxu0
        %1194 = vdwg.mxu0
        %v1196 = vsel %vm937, %v958, 0
        %v1199 = vsel %vm937, %v962, 0
        %1201 = vmatprep.subr.mxu0 0.0
        %1202 = vmatpush1.xpose.msra.mxu0 %v1199
        %1203 = vmatprep.subr.mxu0 0.0
        %1204 = vmatpush1.xpose.msra.mxu0 0.0
        %1205 = vmatprep.subr.mxu0 0.0
        %1206 = vmatpush1.xpose.msra.mxu0 0.0
        %1207 = vmatprep.subr.mxu0 0.0
        %1208 = vmatpush1.xpose.msra.mxu0 0.0
        %1209 = vmatprep.subr.mxu0 0.0
        %1210 = vmatpush1.xpose.msra.mxu0 0.0
        %1211 = vmatprep.subr.mxu0 0.0
        %1212 = vmatpush1.xpose.msra.mxu0 0.0
        %1213 = vmatprep.subr.mxu0 0.0
        %1214 = vmatpush1.xpose.msra.mxu0 0.0
        %1215 = vmatprep.subr.mxu0 0.0
        %1216 = vmatpush1.xpose.msra.mxu0 0.0
        %1217 = vmatprep.subr.mxu0 0.0
        %1218 = vmatpush1.xpose.msra.mxu0 0.0
        %1219 = vmatprep.subr.mxu0 0.0
        %1220 = vmatpush1.xpose.msra.mxu0 0.0
        %1221 = vmatprep.subr.mxu0 0.0
        %1222 = vmatpush1.xpose.msra.mxu0 0.0
        %1223 = vmatprep.subr.mxu0 0.0
        %1224 = vmatpush1.xpose.msra.mxu0 0.0
        %1225 = vmatprep.subr.mxu0 0.0
        %1226 = vmatpush1.xpose.msra.mxu0 0.0
        %1227 = vmatprep.subr.mxu0 0.0
        %1228 = vmatpush1.xpose.msra.mxu0 0.0
        %1229 = vmatprep.subr.mxu0 0.0
        %1230 = vmatpush1.xpose.msra.mxu0 0.0
        %1231 = vmatprep.subr.mxu0 0.0
        %1232 = vmatpush1.xpose.msra.mxu0 0.0
        %1233 = vmatprep.subr.mxu0 0.0
        %1234 = vmatpush1.xpose.msra.mxu0 0.0
        %1235 = vmatprep.subr.mxu0 0.0
        %1236 = vmatpush1.xpose.msra.mxu0 0.0
        %1237 = vmatprep.subr.mxu0 0.0
        %1238 = vmatpush1.xpose.msra.mxu0 0.0
        %1239 = vmatprep.subr.mxu0 0.0
        %1240 = vmatpush1.xpose.msra.mxu0 0.0
        %1241 = vmatprep.subr.mxu0 0.0
        %1242 = vmatpush1.xpose.msra.mxu0 0.0
        %1243 = vmatprep.subr.mxu0 0.0
        %1244 = vmatpush1.xpose.msra.mxu0 0.0
        %1245 = vmatprep.subr.mxu0 0.0
        %1246 = vmatpush1.xpose.msra.mxu0 0.0
        %1247 = vmatprep.subr.mxu0 0.0
        %1248 = vmatpush1.xpose.msra.mxu0 0.0
        %1249 = vmatprep.subr.mxu0 0.0
        %1250 = vmatpush1.xpose.msra.mxu0 0.0
        %1251 = vmatprep.subr.mxu0 0.0
        %1252 = vmatpush1.xpose.msra.mxu0 0.0
        %1253 = vmatprep.subr.mxu0 0.0
        %1254 = vmatpush1.xpose.msra.mxu0 0.0
        %1255 = vmatprep.subr.mxu0 0.0
        %1256 = vmatpush1.xpose.msra.mxu0 0.0
        %1257 = vmatprep.subr.mxu0 0.0
        %1258 = vmatpush1.xpose.msra.mxu0 0.0
        %1259 = vmatprep.subr.mxu0 0.0
        %1260 = vmatpush1.xpose.msra.mxu0 0.0
        %1261 = vmatprep.subr.mxu0 0.0
        %1262 = vmatpush1.xpose.msra.mxu0 0.0
        %1263 = vmatprep.subr.mxu0 0.0
        %1264 = vmatpush1.xpose.msra.mxu0 0.0
        %1265 = vmatprep.mubr.f32.mxu0 0.0
        %1266 = vmatmul.mubr.f32.gmra.mrb[0].mxu0 %v1196
        %v1267 = vpop.f32.mrb[0].mxu0
        %v1268 = vadd.f32 0.0, %v1267
        %v1269 = vpop.f32.mrb[0].mxu0
        %1270 = vdwg.mxu0
        %v1271 = vsel %vm937, %v1040, -inf
        %1272 = vmax.xlane.f32.xlu0 %v1271
        %v1273 = vpop.xlane.xlu0 %1272
        %v1274 = vsel %vm937, %v1116, -inf
        %1275 = vmax.xlane.f32.xlu0 %v1274
        %v1276 = vpop.xlane.xlu0 %1275
        %v1277 = vsel %vm937, %v1192, -inf
        %1278 = vmax.xlane.f32.xlu0 %v1277
        %v1279 = vpop.xlane.xlu0 %1278
        %v1280 = vsel %vm937, %v1268, -inf
        %1281 = vmax.xlane.f32.xlu0 %v1280
        %v1282 = vpop.xlane.xlu0 %1281
        %v1283 = vsub.f32 %v1040, %v1273
        %v1284 = vsub.f32 %v1116, %v1276
        %v1285 = vsub.f32 %v1192, %v1279
        %v1286 = vsub.f32 %v1268, %v1282
        %v1287 = vmul.f32 %v1283, 1.442695
        %v1288 = vpow.pop %v1287
        %v1289 = vmul.f32 %v1284, 1.442695
        %v1290 = vpow.pop %v1289
        %v1291 = vmul.f32 %v1285, 1.442695
        %v1292 = vpow.pop %v1291
        %v1293 = vmul.f32 %v1286, 1.442695
        %v1294 = vpow.pop %v1293
        %v1295 = vsel %vm937, %v1288, 0.0
        %1296 = vadd.xlane.f32.xlu0 %v1295
        %v1297 = vpop.xlane.xlu0 %1296
        %v1298 = vsel %vm937, %v1290, 0.0
        %1299 = vadd.xlane.f32.xlu0 %v1298
        %v1300 = vpop.xlane.xlu0 %1299
        %v1301 = vsel %vm937, %v1292, 0.0
        %1302 = vadd.xlane.f32.xlu0 %v1301
        %v1303 = vpop.xlane.xlu0 %1302
        %v1304 = vsel %vm937, %v1294, 0.0
        %1305 = vadd.xlane.f32.xlu0 %v1304
        %v1306 = vpop.xlane.xlu0 %1305
        %v1307 = vrcp.pop %v1297
        %v1308 = vrcp.pop %v1300
        %v1309 = vrcp.pop %v1303
        %v1310 = vrcp.pop %v1306
        %v1311 = vmul.f32 %v1288, %v1307
        %v1312 = vmul.f32 %v1290, %v1308
        %v1313 = vmul.f32 %v1292, %v1309
        %v1314 = vmul.f32 %v1294, %v1310
        %1315 = vst.msk [vmem:[%s639] sm:$0xff] %vm937, %v1311
        %1316 = vst.msk [vmem:[%s639 + $0x8] sm:$0xff] %vm937, %v1312
        %1317 = vst.msk [vmem:[%s639 + $0x10] sm:$0xff] %vm937, %v1313
        %1318 = vst.msk [vmem:[%s639 + $0x18] sm:$0xff] %vm937, %v1314
        %v1320 = vsel %vm937, %v1311, 0
        %1322 = vmatprep.subr.mxu0 0.0
        %1323 = vmatpush1.msra.mxu0 %v963
        %1324 = vmatprep.subr.mxu0 0.0
        %1325 = vmatpush1.msra.mxu0 0.0
        %1326 = vmatprep.subr.mxu0 0.0
        %1327 = vmatpush1.msra.mxu0 0.0
        %1328 = vmatprep.subr.mxu0 0.0
        %1329 = vmatpush1.msra.mxu0 0.0
        %1330 = vmatprep.subr.mxu0 0.0
        %1331 = vmatpush1.msra.mxu0 0.0
        %1332 = vmatprep.subr.mxu0 0.0
        %1333 = vmatpush1.msra.mxu0 0.0
        %1334 = vmatprep.subr.mxu0 0.0
        %1335 = vmatpush1.msra.mxu0 0.0
        %1336 = vmatprep.subr.mxu0 0.0
        %1337 = vmatpush1.msra.mxu0 0.0
        %1338 = vmatprep.subr.mxu0 0.0
        %1339 = vmatpush1.msra.mxu0 0.0
        %1340 = vmatprep.subr.mxu0 0.0
        %1341 = vmatpush1.msra.mxu0 0.0
        %1342 = vmatprep.subr.mxu0 0.0
        %1343 = vmatpush1.msra.mxu0 0.0
        %1344 = vmatprep.subr.mxu0 0.0
        %1345 = vmatpush1.msra.mxu0 0.0
        %1346 = vmatprep.subr.mxu0 0.0
        %1347 = vmatpush1.msra.mxu0 0.0
        %1348 = vmatprep.subr.mxu0 0.0
        %1349 = vmatpush1.msra.mxu0 0.0
        %1350 = vmatprep.subr.mxu0 0.0
        %1351 = vmatpush1.msra.mxu0 0.0
        %1352 = vmatprep.subr.mxu0 0.0
        %1353 = vmatpush1.msra.mxu0 0.0
        %1354 = vmatprep.subr.mxu0 0.0
        %1355 = vmatpush1.msra.mxu0 0.0
        %1356 = vmatprep.subr.mxu0 0.0
        %1357 = vmatpush1.msra.mxu0 0.0
        %1358 = vmatprep.subr.mxu0 0.0
        %1359 = vmatpush1.msra.mxu0 0.0
        %1360 = vmatprep.subr.mxu0 0.0
        %1361 = vmatpush1.msra.mxu0 0.0
        %1362 = vmatprep.subr.mxu0 0.0
        %1363 = vmatpush1.msra.mxu0 0.0
        %1364 = vmatprep.subr.mxu0 0.0
        %1365 = vmatpush1.msra.mxu0 0.0
        %1366 = vmatprep.subr.mxu0 0.0
        %1367 = vmatpush1.msra.mxu0 0.0
        %1368 = vmatprep.subr.mxu0 0.0
        %1369 = vmatpush1.msra.mxu0 0.0
        %1370 = vmatprep.subr.mxu0 0.0
        %1371 = vmatpush1.msra.mxu0 0.0
        %1372 = vmatprep.subr.mxu0 0.0
        %1373 = vmatpush1.msra.mxu0 0.0
        %1374 = vmatprep.subr.mxu0 0.0
        %1375 = vmatpush1.msra.mxu0 0.0
        %1376 = vmatprep.subr.mxu0 0.0
        %1377 = vmatpush1.msra.mxu0 0.0
        %1378 = vmatprep.subr.mxu0 0.0
        %1379 = vmatpush1.msra.mxu0 0.0
        %1380 = vmatprep.subr.mxu0 0.0
        %1381 = vmatpush1.msra.mxu0 0.0
        %1382 = vmatprep.subr.mxu0 0.0
        %1383 = vmatpush1.msra.mxu0 0.0
        %1384 = vmatprep.subr.mxu0 0.0
        %1385 = vmatpush1.msra.mxu0 0.0
        %1386 = vmatprep.mubr.f32.mxu0 0.0
        %1387 = vmatmul.mubr.f32.gmra.mrb[0].mxu0 %v1320
        %v1388 = vpop.f32.mrb[0].mxu0
        %v1389 = vadd.f32 0.0, %v1388
        %v1390 = vpop.f32.mrb[0].mxu0
        %1391 = vdwg.mxu0
        %v1393 = vsel %vm937, %v1312, 0
        %1395 = vmatprep.subr.mxu0 0.0
        %1396 = vmatpush1.msra.mxu0 %v964
        %1397 = vmatprep.subr.mxu0 0.0
        %1398 = vmatpush1.msra.mxu0 0.0
        %1399 = vmatprep.subr.mxu0 0.0
        %1400 = vmatpush1.msra.mxu0 0.0
        %1401 = vmatprep.subr.mxu0 0.0
        %1402 = vmatpush1.msra.mxu0 0.0
        %1403 = vmatprep.subr.mxu0 0.0
        %1404 = vmatpush1.msra.mxu0 0.0
        %1405 = vmatprep.subr.mxu0 0.0
        %1406 = vmatpush1.msra.mxu0 0.0
        %1407 = vmatprep.subr.mxu0 0.0
        %1408 = vmatpush1.msra.mxu0 0.0
        %1409 = vmatprep.subr.mxu0 0.0
        %1410 = vmatpush1.msra.mxu0 0.0
        %1411 = vmatprep.subr.mxu0 0.0
        %1412 = vmatpush1.msra.mxu0 0.0
        %1413 = vmatprep.subr.mxu0 0.0
        %1414 = vmatpush1.msra.mxu0 0.0
        %1415 = vmatprep.subr.mxu0 0.0
        %1416 = vmatpush1.msra.mxu0 0.0
        %1417 = vmatprep.subr.mxu0 0.0
        %1418 = vmatpush1.msra.mxu0 0.0
        %1419 = vmatprep.subr.mxu0 0.0
        %1420 = vmatpush1.msra.mxu0 0.0
        %1421 = vmatprep.subr.mxu0 0.0
        %1422 = vmatpush1.msra.mxu0 0.0
        %1423 = vmatprep.subr.mxu0 0.0
        %1424 = vmatpush1.msra.mxu0 0.0
        %1425 = vmatprep.subr.mxu0 0.0
        %1426 = vmatpush1.msra.mxu0 0.0
        %1427 = vmatprep.subr.mxu0 0.0
        %1428 = vmatpush1.msra.mxu0 0.0
        %1429 = vmatprep.subr.mxu0 0.0
        %1430 = vmatpush1.msra.mxu0 0.0
        %1431 = vmatprep.subr.mxu0 0.0
        %1432 = vmatpush1.msra.mxu0 0.0
        %1433 = vmatprep.subr.mxu0 0.0
        %1434 = vmatpush1.msra.mxu0 0.0
        %1435 = vmatprep.subr.mxu0 0.0
        %1436 = vmatpush1.msra.mxu0 0.0
        %1437 = vmatprep.subr.mxu0 0.0
        %1438 = vmatpush1.msra.mxu0 0.0
        %1439 = vmatprep.subr.mxu0 0.0
        %1440 = vmatpush1.msra.mxu0 0.0
        %1441 = vmatprep.subr.mxu0 0.0
        %1442 = vmatpush1.msra.mxu0 0.0
        %1443 = vmatprep.subr.mxu0 0.0
        %1444 = vmatpush1.msra.mxu0 0.0
        %1445 = vmatprep.subr.mxu0 0.0
        %1446 = vmatpush1.msra.mxu0 0.0
        %1447 = vmatprep.subr.mxu0 0.0
        %1448 = vmatpush1.msra.mxu0 0.0
        %1449 = vmatprep.subr.mxu0 0.0
        %1450 = vmatpush1.msra.mxu0 0.0
        %1451 = vmatprep.subr.mxu0 0.0
        %1452 = vmatpush1.msra.mxu0 0.0
        %1453 = vmatprep.subr.mxu0 0.0
        %1454 = vmatpush1.msra.mxu0 0.0
        %1455 = vmatprep.subr.mxu0 0.0
        %1456 = vmatpush1.msra.mxu0 0.0
        %1457 = vmatprep.subr.mxu0 0.0
        %1458 = vmatpush1.msra.mxu0 0.0
        %1459 = vmatprep.mubr.f32.mxu0 0.0
        %1460 = vmatmul.mubr.f32.gmra.mrb[0].mxu0 %v1393
        %v1461 = vpop.f32.mrb[0].mxu0
        %v1462 = vadd.f32 0.0, %v1461
        %v1463 = vpop.f32.mrb[0].mxu0
        %1464 = vdwg.mxu0
        %v1466 = vsel %vm937, %v1313, 0
        %1468 = vmatprep.subr.mxu0 0.0
        %1469 = vmatpush1.msra.mxu0 %v965
        %1470 = vmatprep.subr.mxu0 0.0
        %1471 = vmatpush1.msra.mxu0 0.0
        %1472 = vmatprep.subr.mxu0 0.0
        %1473 = vmatpush1.msra.mxu0 0.0
        %1474 = vmatprep.subr.mxu0 0.0
        %1475 = vmatpush1.msra.mxu0 0.0
        %1476 = vmatprep.subr.mxu0 0.0
        %1477 = vmatpush1.msra.mxu0 0.0
        %1478 = vmatprep.subr.mxu0 0.0
        %1479 = vmatpush1.msra.mxu0 0.0
        %1480 = vmatprep.subr.mxu0 0.0
        %1481 = vmatpush1.msra.mxu0 0.0
        %1482 = vmatprep.subr.mxu0 0.0
        %1483 = vmatpush1.msra.mxu0 0.0
        %1484 = vmatprep.subr.mxu0 0.0
        %1485 = vmatpush1.msra.mxu0 0.0
        %1486 = vmatprep.subr.mxu0 0.0
        %1487 = vmatpush1.msra.mxu0 0.0
        %1488 = vmatprep.subr.mxu0 0.0
        %1489 = vmatpush1.msra.mxu0 0.0
        %1490 = vmatprep.subr.mxu0 0.0
        %1491 = vmatpush1.msra.mxu0 0.0
        %1492 = vmatprep.subr.mxu0 0.0
        %1493 = vmatpush1.msra.mxu0 0.0
        %1494 = vmatprep.subr.mxu0 0.0
        %1495 = vmatpush1.msra.mxu0 0.0
        %1496 = vmatprep.subr.mxu0 0.0
        %1497 = vmatpush1.msra.mxu0 0.0
        %1498 = vmatprep.subr.mxu0 0.0
        %1499 = vmatpush1.msra.mxu0 0.0
        %1500 = vmatprep.subr.mxu0 0.0
        %1501 = vmatpush1.msra.mxu0 0.0
        %1502 = vmatprep.subr.mxu0 0.0
        %1503 = vmatpush1.msra.mxu0 0.0
        %1504 = vmatprep.subr.mxu0 0.0
        %1505 = vmatpush1.msra.mxu0 0.0
        %1506 = vmatprep.subr.mxu0 0.0
        %1507 = vmatpush1.msra.mxu0 0.0
        %1508 = vmatprep.subr.mxu0 0.0
        %1509 = vmatpush1.msra.mxu0 0.0
        %1510 = vmatprep.subr.mxu0 0.0
        %1511 = vmatpush1.msra.mxu0 0.0
        %1512 = vmatprep.subr.mxu0 0.0
        %1513 = vmatpush1.msra.mxu0 0.0
        %1514 = vmatprep.subr.mxu0 0.0
        %1515 = vmatpush1.msra.mxu0 0.0
        %1516 = vmatprep.subr.mxu0 0.0
        %1517 = vmatpush1.msra.mxu0 0.0
        %1518 = vmatprep.subr.mxu0 0.0
        %1519 = vmatpush1.msra.mxu0 0.0
        %1520 = vmatprep.subr.mxu0 0.0
        %1521 = vmatpush1.msra.mxu0 0.0
        %1522 = vmatprep.subr.mxu0 0.0
        %1523 = vmatpush1.msra.mxu0 0.0
        %1524 = vmatprep.subr.mxu0 0.0
        %1525 = vmatpush1.msra.mxu0 0.0
        %1526 = vmatprep.subr.mxu0 0.0
        %1527 = vmatpush1.msra.mxu0 0.0
        %1528 = vmatprep.subr.mxu0 0.0
        %1529 = vmatpush1.msra.mxu0 0.0
        %1530 = vmatprep.subr.mxu0 0.0
        %1531 = vmatpush1.msra.mxu0 0.0
        %1532 = vmatprep.mubr.f32.mxu0 0.0
        %1533 = vmatmul.mubr.f32.gmra.mrb[0].mxu0 %v1466
        %v1534 = vpop.f32.mrb[0].mxu0
        %v1535 = vadd.f32 0.0, %v1534
        %v1536 = vpop.f32.mrb[0].mxu0
        %1537 = vdwg.mxu0
        %v1539 = vsel %vm937, %v1314, 0
        %1541 = vmatprep.subr.mxu0 0.0
        %1542 = vmatpush1.msra.mxu0 %v966
        %1543 = vmatprep.subr.mxu0 0.0
        %1544 = vmatpush1.msra.mxu0 0.0
        %1545 = vmatprep.subr.mxu0 0.0
        %1546 = vmatpush1.msra.mxu0 0.0
        %1547 = vmatprep.subr.mxu0 0.0
        %1548 = vmatpush1.msra.mxu0 0.0
        %1549 = vmatprep.subr.mxu0 0.0
        %1550 = vmatpush1.msra.mxu0 0.0
        %1551 = vmatprep.subr.mxu0 0.0
        %1552 = vmatpush1.msra.mxu0 0.0
        %1553 = vmatprep.subr.mxu0 0.0
        %1554 = vmatpush1.msra.mxu0 0.0
        %1555 = vmatprep.subr.mxu0 0.0
        %1556 = vmatpush1.msra.mxu0 0.0
        %1557 = vmatprep.subr.mxu0 0.0
        %1558 = vmatpush1.msra.mxu0 0.0
        %1559 = vmatprep.subr.mxu0 0.0
        %1560 = vmatpush1.msra.mxu0 0.0
        %1561 = vmatprep.subr.mxu0 0.0
        %1562 = vmatpush1.msra.mxu0 0.0
        %1563 = vmatprep.subr.mxu0 0.0
        %1564 = vmatpush1.msra.mxu0 0.0
        %1565 = vmatprep.subr.mxu0 0.0
        %1566 = vmatpush1.msra.mxu0 0.0
        %1567 = vmatprep.subr.mxu0 0.0
        %1568 = vmatpush1.msra.mxu0 0.0
        %1569 = vmatprep.subr.mxu0 0.0
        %1570 = vmatpush1.msra.mxu0 0.0
        %1571 = vmatprep.subr.mxu0 0.0
        %1572 = vmatpush1.msra.mxu0 0.0
        %1573 = vmatprep.subr.mxu0 0.0
        %1574 = vmatpush1.msra.mxu0 0.0
        %1575 = vmatprep.subr.mxu0 0.0
        %1576 = vmatpush1.msra.mxu0 0.0
        %1577 = vmatprep.subr.mxu0 0.0
        %1578 = vmatpush1.msra.mxu0 0.0
        %1579 = vmatprep.subr.mxu0 0.0
        %1580 = vmatpush1.msra.mxu0 0.0
        %1581 = vmatprep.subr.mxu0 0.0
        %1582 = vmatpush1.msra.mxu0 0.0
        %1583 = vmatprep.subr.mxu0 0.0
        %1584 = vmatpush1.msra.mxu0 0.0
        %1585 = vmatprep.subr.mxu0 0.0
        %1586 = vmatpush1.msra.mxu0 0.0
        %1587 = vmatprep.subr.mxu0 0.0
        %1588 = vmatpush1.msra.mxu0 0.0
        %1589 = vmatprep.subr.mxu0 0.0
        %1590 = vmatpush1.msra.mxu0 0.0
        %1591 = vmatprep.subr.mxu0 0.0
        %1592 = vmatpush1.msra.mxu0 0.0
        %1593 = vmatprep.subr.mxu0 0.0
        %1594 = vmatpush1.msra.mxu0 0.0
        %1595 = vmatprep.subr.mxu0 0.0
        %1596 = vmatpush1.msra.mxu0 0.0
        %1597 = vmatprep.subr.mxu0 0.0
        %1598 = vmatpush1.msra.mxu0 0.0
        %1599 = vmatprep.subr.mxu0 0.0
        %1600 = vmatpush1.msra.mxu0 0.0
        %1601 = vmatprep.subr.mxu0 0.0
        %1602 = vmatpush1.msra.mxu0 0.0
        %1603 = vmatprep.subr.mxu0 0.0
        %1604 = vmatpush1.msra.mxu0 0.0
        %1605 = vmatprep.mubr.f32.mxu0 0.0
        %1606 = vmatmul.mubr.f32.gmra.mrb[0].mxu0 %v1539
        %v1607 = vpop.f32.mrb[0].mxu0
        %v1608 = vadd.f32 0.0, %v1607
        %v1609 = vpop.f32.mrb[0].mxu0
        %1610 = vdwg.mxu0
        %1611 = vst.msk [vmem:[#allocation5] sm:$0xff] %vm937, %v1389
        %1613 = vrot.lane.b32.xlu0 %v1462, 8
        %v1614 = vpop.permute.xlu0 %1613
        %vm1616 = vcmask 130112
        %1617 = vst.msk [vmem:[#allocation5] sm:$0xff] %vm1616, %v1614
        %1619 = vrot.lane.b32.xlu0 %v1535, 16
        %v1620 = vpop.permute.xlu0 %1619
        %vm1622 = vcmask 195712
        %1623 = vst.msk [vmem:[#allocation5] sm:$0xff] %vm1622, %v1620
        %1625 = vrot.lane.b32.xlu0 %v1608, 24
        %v1626 = vpop.permute.xlu0 %1625
        %vm1628 = vcmask 261312
        %1629 = vst.msk [vmem:[#allocation5] sm:$0xff] %vm1628, %v1626
        %v1630 = vld [vmem:[#allocation5] sm:$0xff]
        %v1631 = vld [vmem:[%s9] sm:$0xff]
        %v1632 = vld [vmem:[%s9 + $0x8] sm:$0xff]
        %v1633 = vld [vmem:[%s9 + $0x10] sm:$0xff]
        %v1634 = vld [vmem:[%s9 + $0x18] sm:$0xff]
        %v1635 = vld [vmem:[%s10] sm:$0x1]
        %v1637 = vlaneseq
        %v1638 = vshrl.u32 %v1637, 7
        %v1639 = vsub.s32 0, %v1638
        %v1640 = vrot.slane %v1635, %v1639
        %v1643 = vsel %vm862, %v1630, 0
        %1645 = vmatprep.subr.mxu0 0.0
        %1646 = vmatpush1.msra.mxu0 %v1631
        %1647 = vmatprep.subr.mxu0 0.0
        %1648 = vmatpush1.msra.mxu0 %v1632
        %1649 = vmatprep.subr.mxu0 0.0
        %1650 = vmatpush1.msra.mxu0 %v1633
        %1651 = vmatprep.subr.mxu0 0.0
        %1652 = vmatpush1.msra.mxu0 %v1634
        %1653 = vmatprep.subr.mxu0 0.0
        %1654 = vmatpush1.msra.mxu0 0.0
        %1655 = vmatprep.subr.mxu0 0.0
        %1656 = vmatpush1.msra.mxu0 0.0
        %1657 = vmatprep.subr.mxu0 0.0
        %1658 = vmatpush1.msra.mxu0 0.0
        %1659 = vmatprep.subr.mxu0 0.0
        %1660 = vmatpush1.msra.mxu0 0.0
        %1661 = vmatprep.subr.mxu0 0.0
        %1662 = vmatpush1.msra.mxu0 0.0
        %1663 = vmatprep.subr.mxu0 0.0
        %1664 = vmatpush1.msra.mxu0 0.0
        %1665 = vmatprep.subr.mxu0 0.0
        %1666 = vmatpush1.msra.mxu0 0.0
        %1667 = vmatprep.subr.mxu0 0.0
        %1668 = vmatpush1.msra.mxu0 0.0
        %1669 = vmatprep.subr.mxu0 0.0
        %1670 = vmatpush1.msra.mxu0 0.0
        %1671 = vmatprep.subr.mxu0 0.0
        %1672 = vmatpush1.msra.mxu0 0.0
        %1673 = vmatprep.subr.mxu0 0.0
        %1674 = vmatpush1.msra.mxu0 0.0
        %1675 = vmatprep.subr.mxu0 0.0
        %1676 = vmatpush1.msra.mxu0 0.0
        %1677 = vmatprep.subr.mxu0 0.0
        %1678 = vmatpush1.msra.mxu0 0.0
        %1679 = vmatprep.subr.mxu0 0.0
        %1680 = vmatpush1.msra.mxu0 0.0
        %1681 = vmatprep.subr.mxu0 0.0
        %1682 = vmatpush1.msra.mxu0 0.0
        %1683 = vmatprep.subr.mxu0 0.0
        %1684 = vmatpush1.msra.mxu0 0.0
        %1685 = vmatprep.subr.mxu0 0.0
        %1686 = vmatpush1.msra.mxu0 0.0
        %1687 = vmatprep.subr.mxu0 0.0
        %1688 = vmatpush1.msra.mxu0 0.0
        %1689 = vmatprep.subr.mxu0 0.0
        %1690 = vmatpush1.msra.mxu0 0.0
        %1691 = vmatprep.subr.mxu0 0.0
        %1692 = vmatpush1.msra.mxu0 0.0
        %1693 = vmatprep.subr.mxu0 0.0
        %1694 = vmatpush1.msra.mxu0 0.0
        %1695 = vmatprep.subr.mxu0 0.0
        %1696 = vmatpush1.msra.mxu0 0.0
        %1697 = vmatprep.subr.mxu0 0.0
        %1698 = vmatpush1.msra.mxu0 0.0
        %1699 = vmatprep.subr.mxu0 0.0
        %1700 = vmatpush1.msra.mxu0 0.0
        %1701 = vmatprep.subr.mxu0 0.0
        %1702 = vmatpush1.msra.mxu0 0.0
        %1703 = vmatprep.subr.mxu0 0.0
        %1704 = vmatpush1.msra.mxu0 0.0
        %1705 = vmatprep.subr.mxu0 0.0
        %1706 = vmatpush1.msra.mxu0 0.0
        %1707 = vmatprep.subr.mxu0 0.0
        %1708 = vmatpush1.msra.mxu0 0.0
        %1709 = vmatprep.mubr.f32.mxu0 0.0
        %1710 = vmatmul.mubr.f32.gmra.mrb[0].mxu0 %v1643
        %v1711 = vpop.f32.mrb[0].mxu0
        %v1712 = vadd.f32 %v1640, %v1711
        %v1713 = vpop.f32.mrb[0].mxu0
        %1714 = vdwg.mxu0
        %v1715 = vadd.f32 %v850, %v1712
        %v1716 = vsel %vm862, %v1715, 0.0
        %1717 = vadd.xlane.f32.xlu0 %v1716
        %v1718 = vpop.xlane.xlu0 %1717
        %v1719 = vrcp.pop 32.0
        %v1720 = vmul.f32 %v1718, %v1719
        %v1721 = vsub.f32 %v1715, %v1720
        %v1722 = vmul.f32 %v1721, %v1721
        %v1723 = vsel %vm862, %v1722, 0.0
        %1724 = vadd.xlane.f32.xlu0 %v1723
        %v1725 = vpop.xlane.xlu0 %1724
        %v1726 = vmul.f32 %v1725, %v1719
        %v1727 = vadd.f32 %v1726, 1e-05
        %v1728 = vrsqrt.pop %v1727
        %v1729 = vmul.f32 %v1721, %v1728
        %v1730 = vld [vmem:[%s11] sm:$0x1]
        %v1732 = vlaneseq
        %v1733 = vshrl.u32 %v1732, 7
        %v1734 = vsub.s32 0, %v1733
        %v1735 = vrot.slane %v1730, %v1734
        %v1737 = vmul.f32 %v1729, %v1735
        %v1738 = vld [vmem:[%s12] sm:$0x1]
        %v1740 = vlaneseq
        %v1741 = vshrl.u32 %v1740, 7
        %v1742 = vsub.s32 0, %v1741
        %v1743 = vrot.slane %v1738, %v1742
        %v1745 = vadd.f32 %v1737, %v1743
        %1746 = vst.msk [vmem:[%s632] sm:$0xff] %vm862, %v1745
        %s1747 = sand.u32 %s352, 1
        %s1748 = scalar_lea.sflag [#allocation8], %s1747
        %s1749 = sand.u32 %s352, 1
        %s1750 = smul.addr %s1749, 8
        %s1751 = scalar_lea.vmem [#allocation18], %s1750
        %s1752 = sand.u32 %s380, 1
        %s1753 = scalar_lea.sflag [#allocation20], %s1752
        %s1754 = sand.u32 %s380, 1
        %s1755 = smul.addr %s1754, 32
        %s1756 = scalar_lea.vmem [#allocation19], %s1755
        // Predicated region
        $region105: #{tpu_custom_call.1} parent=71 // pred_check
          %p1757 = pneg %p362
        $region106: #{tpu_custom_call.1} parent=71 // pred_check_branch
          %1759 = sbr.rel (%p1757) target = $region108
        $region107: #{tpu_custom_call.1} parent=71 // pred_region
          %s1761 = ssub.s32 128, 128
          %1762 = vsyncadd %s1748, %s1761
          %s1763 = sadd.s32 %s45, %s44
          %s1764 = smul.addr %s1763, 128
          %s1765 = scalar_lea.hbm %s13, %s1764
          %s1767 = sshll.u32 %s1751, 4
          %s1768 = int_to_ptr.vmem [resolvable:$true] %s1767
          %1770 = dma.vmem_to_hbm [thread:$0]  %s1768, 128, %s1765, %s1748
        $region108: #{tpu_custom_call.1} parent=71 // pred_fallthru
          _
        // Predicated region
        $region109: #{tpu_custom_call.1} parent=71 // pred_check
          %p1771 = pneg %p390
        $region110: #{tpu_custom_call.1} parent=71 // pred_check_branch
          %1773 = sbr.rel (%p1771) target = $region112
        $region111: #{tpu_custom_call.1} parent=71 // pred_region
          %s1775 = ssub.s32 512, 512
          %1776 = vsyncadd %s1753, %s1775
          %s1777 = smul.addr %s44, 4
          %s1778 = sadd.s32 %s45, %s1777
          %s1779 = smul.addr %s1778, 128
          %s1780 = scalar_lea.hbm %s14, %s1779
          %s1781 = sshll.u32 %s1756, 4
          %s1782 = int_to_ptr.vmem [resolvable:$true] %s1781
          %1787 = dma.vmem_to_hbm [thread:$0]  %s1782, 512, %s1780, %s1753, 128, 128, 8
        $region112: #{tpu_custom_call.1} parent=71 // pred_fallthru
          _
      $region72: #{tpu_custom_call.1} parent=5 // pred_fallthru
        _
      %p1788 = scmp.le.s32.totalorder 2, %s35
      // Predicated region
      $region113: #{tpu_custom_call.1} parent=5 // pred_check
        %p1789 = pneg %p1788
      $region114: #{tpu_custom_call.1} parent=5 // pred_check_branch
        %1791 = sbr.rel (%p1789) target = $region116
      $region115: #{tpu_custom_call.1} parent=5 // pred_region
        %s1792 = ssub.s32 %s35, 2
        // Predicated region
        $region117: #{tpu_custom_call.1} parent=115 // pred_check
          %p1793 = pneg %p368
        $region118: #{tpu_custom_call.1} parent=115 // pred_check_branch
          %1795 = sbr.rel (%p1793) target = $region120
        $region119: #{tpu_custom_call.1} parent=115 // pred_region
          %s1796 = sand.u32 %s353, 1
          %s1797 = scalar_lea.sflag [#allocation8], %s1796
          %s1798 = sand.u32 %s353, 1
          %s1799 = smul.addr %s1798, 8
          %s1800 = scalar_lea.vmem [#allocation18], %s1799
          %1801 = dma.done %s1797, 128
        $region120: #{tpu_custom_call.1} parent=115 // pred_fallthru
          _
        // Predicated region
        $region121: #{tpu_custom_call.1} parent=115 // pred_check
          %p1802 = pneg %p396
        $region122: #{tpu_custom_call.1} parent=115 // pred_check_branch
          %1804 = sbr.rel (%p1802) target = $region124
        $region123: #{tpu_custom_call.1} parent=115 // pred_region
          %s1805 = sand.u32 %s381, 1
          %s1806 = scalar_lea.sflag [#allocation20], %s1805
          %s1807 = sand.u32 %s381, 1
          %s1808 = smul.addr %s1807, 32
          %s1809 = scalar_lea.vmem [#allocation19], %s1808
          %1810 = dma.done %s1806, 512
        $region124: #{tpu_custom_call.1} parent=115 // pred_fallthru
          _
      $region116: #{tpu_custom_call.1} parent=5 // pred_fallthru
        _
    $region6: #{tpu_custom_call.1} parent=1 // loop_footer
      %s39 = sadd.s32 1, %s35
    $region7: #{tpu_custom_call.1} parent=1 // loop_footer_branch
      %34 = sbr.rel target = $region3
    $region8: #{tpu_custom_call.1} parent=1 // loop_exit
      _
    %1811 = vsyncpa [#allocation7], 1
    %s1812 = scalar_lea.sflag [#allocation7], 1
    %1813 = vsyncpa %s1812, 1
    %1814 = vsyncpa [#allocation10], 1
    %s1815 = scalar_lea.sflag [#allocation10], 1
    %1816 = vsyncpa %s1815, 1
    %1817 = vsyncpa [#allocation13], 1
    %1818 = vsyncpa [#allocation16], 1
    %1819 = vsyncpa [#allocation8], 1
    %s1820 = scalar_lea.sflag [#allocation8], 1
    %1821 = vsyncpa %s1820, 1
    %1822 = vsyncpa [#allocation20], 1
    %s1823 = scalar_lea.sflag [#allocation20], 1
    %1824 = vsyncpa %s1823, 1

</llo_original>
